<compile_context>
chip_gen: v7x
topology: tpu7x:2x2x1
jax: 0.10.0
libtpu: 0.0.40
codegen_flags: <defaults>
</compile_context>

<pallas_src>
import functools

import jax
import jax.numpy as jnp
import numpy as np
from jax import lax
from jax.experimental import pallas as pl
from jax.experimental.pallas import tpu as pltpu


def _mha_kernel(x_ref, wqkv_ref, wp_ref, bp_ref, o_ref, *, num_heads):
    # x_ref:    (T, C)        bf16   (batch dim squeezed by BlockSpec)
    # wqkv_ref: (C, 3*H*hs)   bf16   [K heads | Q heads (pre-scaled) | V heads]
    # wp_ref:   (H*hs, C_out) bf16   output projection (head-concat rows)
    # bp_ref:   (1, C_out)    f32    output-projection bias
    # o_ref:    (T, C_out)    out dtype, written once per grid step
    x = x_ref[...]                                  # (T, C) bf16
    T = x.shape[0]
    D = wqkv_ref.shape[1] // 3                      # H * hs (= n_embd here)
    hs = D // num_heads

    # One fused, 3D-wide QKV matmul for all heads (f32 MXU accumulation).
    qkv = jnp.dot(x, wqkv_ref[...], preferred_element_type=jnp.float32)   # (T, 3D)

    # Lane-aligned slab slices (D is a multiple of 128).
    k = qkv[:, 0 * D:1 * D].astype(jnp.bfloat16)
    q = qkv[:, 1 * D:2 * D].astype(jnp.bfloat16)    # n_embd**-0.5 already folded in
    v = qkv[:, 2 * D:3 * D].astype(jnp.bfloat16)

    # Causal mask: built once per body, reused by every head (loop-invariant).
    row = lax.broadcasted_iota(jnp.int32, (T, T), 0)
    col = lax.broadcasted_iota(jnp.int32, (T, T), 1)
    causal = row >= col
    neg = jnp.float32(-1e30)                        # finite => NaN-safe masking

    outs = []
    for h in range(num_heads):                      # static unroll (H is small)
        kh = k[:, h * hs:(h + 1) * hs]              # (T, hs)
        qh = q[:, h * hs:(h + 1) * hs]
        vh = v[:, h * hs:(h + 1) * hs]

        # Scores = K @ Q^T (exactly as the PyTorch module), f32 accumulation.
        wei = lax.dot_general(kh, qh, (((1,), (1,)), ((), ())),
                              preferred_element_type=jnp.float32)         # (T, T)
        wei = jnp.where(causal, wei, neg)

        # Numerically stable softmax along the last axis (f32; divide -> EUP).
        m = jnp.max(wei, axis=-1, keepdims=True)
        e = jnp.exp(wei - m)
        p = e * pl.reciprocal(jnp.sum(e, axis=-1, keepdims=True), approx=True)

        outs.append(jnp.dot(p.astype(jnp.bfloat16), vh,
                            preferred_element_type=jnp.float32))          # (T, hs)

    out = jnp.concatenate(outs, axis=-1).astype(jnp.bfloat16)             # (T, D)

    # Single k=D-deep output projection + bias; one lane-dense (T, C) store.
    o_ref[...] = (jnp.dot(out, wp_ref[...], preferred_element_type=jnp.float32)
                  + bp_ref[...]).astype(o_ref.dtype)


def pack_mha_params(wk, wq, wv, wp, bp):
    """One-time weight packing -- call this OUTSIDE the per-step forward path.

    wk/wq/wv: (H, C, hs), wp: (H*hs, C_out), bp: (C_out,)
    Returns:
      wqkv: (C, 3*H*hs) bf16 = [K heads | Q heads * n_embd**-0.5 | V heads]
      wp:   (H*hs, C_out) bf16
      bp2:  (1, C_out)    f32
    """
    H, C, hs = wk.shape
    scale = float(C) ** -0.5                 # module quirk: scales by n_embd**-0.5

    def per_head_to_cols(w):                 # (H, C, hs) -> (C, H*hs), head-major cols
        return jnp.transpose(w, (1, 0, 2)).reshape(C, H * hs)

    wqkv = jnp.concatenate(
        [per_head_to_cols(wk),
         per_head_to_cols(wq) * scale,       # fold the score scale into Wq
         per_head_to_cols(wv)], axis=-1).astype(jnp.bfloat16)
    return wqkv, wp.astype(jnp.bfloat16), bp.reshape(1, -1).astype(jnp.float32)


@functools.partial(jax.jit, static_argnames=("num_heads",))
def multi_head_attention(x, wqkv, wp, bp2, *, num_heads):
    """x: (B, T, C); wqkv: (C, 3*H*hs); wp: (H*hs, C_out); bp2: (1, C_out)."""
    B, T, C = x.shape
    D3 = wqkv.shape[1]
    Din, Cout = wp.shape
    x_b = x.astype(jnp.bfloat16)

    kernel = functools.partial(_mha_kernel, num_heads=num_heads)
    return pl.pallas_call(
        kernel,
        out_shape=jax.ShapeDtypeStruct((B, T, Cout), x.dtype),
        grid_spec=pltpu.PrefetchScalarGridSpec(
            num_scalar_prefetch=0,
            grid=(B,),                                            # one fat step / batch row
            in_specs=[
                pl.BlockSpec((None, T, C), lambda b: (b, 0, 0)),  # x (batch squeezed)
                pl.BlockSpec((C, D3), lambda b: (0, 0)),          # packed QKV weight
                pl.BlockSpec((Din, Cout), lambda b: (0, 0)),      # output projection
                pl.BlockSpec((1, Cout), lambda b: (0, 0)),        # bias
            ],
            out_specs=pl.BlockSpec((None, T, Cout), lambda b: (b, 0, 0)),
        ),
        compiler_params=pltpu.CompilerParams(
            dimension_semantics=("parallel",),                    # B>=2 keeps both v7x TCs busy
            vmem_limit_bytes=32 * 1024 * 1024),
    )(x_b, wqkv, wp, bp2)


def _reference(x, wk, wq, wv, wp, bp):
    """Pure-JAX f32 reference mirroring the PyTorch forward (eval mode)."""
    B, T, C = x.shape
    H = wk.shape[0]
    tril = jnp.tril(jnp.ones((T, T), jnp.float32))
    outs = []
    for h in range(H):
        k = x @ wk[h]
        q = x @ wq[h]
        v = x @ wv[h]
        wei = (k @ jnp.swapaxes(q, -1, -2)) * (C ** -0.5)
        wei = jnp.where(tril == 0, -jnp.inf, wei)
        wei = jax.nn.softmax(wei, axis=-1)
        outs.append(wei @ v)
    cat = jnp.concatenate(outs, axis=-1)
    return cat @ wp + bp


if __name__ == "__main__":
    # Small, self-consistent shapes (scaled-down n_embd / block_size); T/C are
    # multiples of 128 so score tiles and slab slices are lane-dense/aligned.
    B, T = 2, 128
    n_embd = 128          # hidden size (C)
    num_heads = 4
    head_size = 32        # num_heads * head_size == n_embd

    key = jax.random.PRNGKey(0)
    kx, kk, kq, kv, kp, kb = jax.random.split(key, 6)

    x = jax.random.normal(kx, (B, T, n_embd), jnp.float32)

    # Deterministic parameter init (roughly nn.Linear's uniform scale).
    s_in = 1.0 / np.sqrt(n_embd)
    wk = jax.random.uniform(kk, (num_heads, n_embd, head_size), jnp.float32, -s_in, s_in)
    wq = jax.random.uniform(kq, (num_heads, n_embd, head_size), jnp.float32, -s_in, s_in)
    wv = jax.random.uniform(kv, (num_heads, n_embd, head_size), jnp.float32, -s_in, s_in)
    s_p = 1.0 / np.sqrt(num_heads * head_size)
    wp = jax.random.uniform(kp, (num_heads * head_size, n_embd), jnp.float32, -s_p, s_p)
    bp = jax.random.uniform(kb, (n_embd,), jnp.float32, -s_p, s_p)

    # One-time weight packing (kept out of the per-call forward path).
    wqkv_p, wp_p, bp_p = pack_mha_params(wk, wq, wv, wp, bp)

    out = jax.block_until_ready(
        multi_head_attention(x, wqkv_p, wp_p, bp_p, num_heads=num_heads))
    ref = _reference(x, wk, wq, wv, wp, bp)

    # Kernel runs its matmuls with bf16 MXU operands (f32 accumulate), so compare
    # against the pure-f32 reference with a correspondingly loose tolerance.
    np.testing.assert_allclose(np.asarray(out), np.asarray(ref), rtol=2e-2, atol=2e-2)

    print("KERNEL_OK")
</pallas_src>

<mosaic_0001>
module attributes {stable_mosaic.version = 11 : i64} {
  func.func @_mha_kernel(%arg0: i32, %arg1: memref<1x128x128xbf16, #tpu.memory_space<vmem>>, %arg2: memref<128x384xbf16, #tpu.memory_space<vmem>>, %arg3: memref<128x128xbf16, #tpu.memory_space<vmem>>, %arg4: memref<1x128xf32, #tpu.memory_space<vmem>>, %arg5: memref<1x128x128xf32, #tpu.memory_space<vmem>>) attributes {dimension_semantics = [#tpu.dimension_semantics<parallel>], iteration_bounds = array<i64: 2>, scalar_prefetch = 0 : i64, scratch_operands = 0 : i64, tpu.core_type = #tpu.core_type<tc>, window_params = [{transform_indices = @transform_0, window_bounds = array<i64: 1, 128, 128>}, {pipeline_mode = #tpu.pipeline_mode<synchronous>, transform_indices = @transform_1, window_bounds = array<i64: 128, 384>}, {pipeline_mode = #tpu.pipeline_mode<synchronous>, transform_indices = @transform_2, window_bounds = array<i64: 128, 128>}, {pipeline_mode = #tpu.pipeline_mode<synchronous>, transform_indices = @transform_3, window_bounds = array<i64: 1, 128>}, {transform_indices = @transform_4, window_bounds = array<i64: 1, 128, 128>}]} {
    %c0 = arith.constant 0 : index
    %c0_0 = arith.constant 0 : index
    %c0_1 = arith.constant 0 : index
    %0 = vector.load %arg1[%c0, %c0_0, %c0_1] : memref<1x128x128xbf16, #tpu.memory_space<vmem>>, vector<1x128x128xbf16>
    %1 = vector.shape_cast %0 : vector<1x128x128xbf16> to vector<128x128xbf16>
    %c0_2 = arith.constant 0 : index
    %c0_3 = arith.constant 0 : index
    %2 = vector.load %arg2[%c0_2, %c0_3] : memref<128x384xbf16, #tpu.memory_space<vmem>>, vector<128x384xbf16>
    %cst = arith.constant dense<0.000000e+00> : vector<128x384xf32>
    %3 = tpu.matmul %1, %2, %cst {dimension_numbers = #tpu.dot_dimension_numbers<[1], [0], [0], [1], [0, 0, 1, 1], [], []>} : vector<128x128xbf16>, vector<128x384xbf16>, vector<128x384xf32> -> vector<128x384xf32>
    %4 = vector.extract_strided_slice %3 {offsets = [0, 0], sizes = [128, 128], strides = [1, 1]} : vector<128x384xf32> to vector<128x128xf32>
    %5 = arith.truncf %4 : vector<128x128xf32> to vector<128x128xbf16>
    %6 = vector.extract_strided_slice %3 {offsets = [0, 128], sizes = [128, 128], strides = [1, 1]} : vector<128x384xf32> to vector<128x128xf32>
    %7 = arith.truncf %6 : vector<128x128xf32> to vector<128x128xbf16>
    %8 = vector.extract_strided_slice %3 {offsets = [0, 256], sizes = [128, 128], strides = [1, 1]} : vector<128x384xf32> to vector<128x128xf32>
    %9 = arith.truncf %8 : vector<128x128xf32> to vector<128x128xbf16>
    %10 = tpu.iota {dimensions = array<i32: 0>} : vector<128x128xi32>
    %11 = tpu.iota {dimensions = array<i32: 1>} : vector<128x128xi32>
    %12 = arith.cmpi sge, %10, %11 : vector<128x128xi32>
    %13 = vector.extract_strided_slice %5 {offsets = [0, 0], sizes = [128, 32], strides = [1, 1]} : vector<128x128xbf16> to vector<128x32xbf16>
    %14 = vector.extract_strided_slice %7 {offsets = [0, 0], sizes = [128, 32], strides = [1, 1]} : vector<128x128xbf16> to vector<128x32xbf16>
    %15 = vector.extract_strided_slice %9 {offsets = [0, 0], sizes = [128, 32], strides = [1, 1]} : vector<128x128xbf16> to vector<128x32xbf16>
    %cst_4 = arith.constant dense<0.000000e+00> : vector<128x128xf32>
    %16 = tpu.matmul %13, %14, %cst_4 {dimension_numbers = #tpu.dot_dimension_numbers<[1], [1], [0], [0], [0, 0, 1, 0], [], []>} : vector<128x32xbf16>, vector<128x32xbf16>, vector<128x128xf32> -> vector<128x128xf32>
    %cst_5 = arith.constant -1.000000e+30 : f32
    %17 = vector.broadcast %cst_5 : f32 to vector<128x128xf32>
    %18 = arith.select %12, %16, %17 : vector<128x128xi1>, vector<128x128xf32>
    %cst_6 = arith.constant dense<0xFF800000> : vector<128xf32>
    %19 = vector.multi_reduction <maximumf>, %18, %cst_6 [1] : vector<128x128xf32> to vector<128xf32>
    %20 = vector.shape_cast %19 : vector<128xf32> to vector<128x1xf32>
    %21 = vector.broadcast %20 : vector<128x1xf32> to vector<128x128xf32>
    %22 = arith.subf %18, %21 : vector<128x128xf32>
    %23 = math.exp %22 : vector<128x128xf32>
    %cst_7 = arith.constant dense<0.000000e+00> : vector<128xf32>
    %24 = vector.multi_reduction <add>, %23, %cst_7 [1] : vector<128x128xf32> to vector<128xf32>
    %25 = vector.shape_cast %24 : vector<128xf32> to vector<128x1xf32>
    %26 = tpu.reciprocal %25 {approx = true} : vector<128x1xf32> -> vector<128x1xf32>
    %27 = vector.broadcast %26 : vector<128x1xf32> to vector<128x128xf32>
    %28 = arith.mulf %23, %27 : vector<128x128xf32>
    %29 = arith.truncf %28 : vector<128x128xf32> to vector<128x128xbf16>
    %cst_8 = arith.constant dense<0.000000e+00> : vector<128x32xf32>
    %30 = tpu.matmul %29, %15, %cst_8 {dimension_numbers = #tpu.dot_dimension_numbers<[1], [0], [0], [1], [0, 0, 1, 1], [], []>} : vector<128x128xbf16>, vector<128x32xbf16>, vector<128x32xf32> -> vector<128x32xf32>
    %31 = vector.extract_strided_slice %5 {offsets = [0, 32], sizes = [128, 32], strides = [1, 1]} : vector<128x128xbf16> to vector<128x32xbf16>
    %32 = vector.extract_strided_slice %7 {offsets = [0, 32], sizes = [128, 32], strides = [1, 1]} : vector<128x128xbf16> to vector<128x32xbf16>
    %33 = vector.extract_strided_slice %9 {offsets = [0, 32], sizes = [128, 32], strides = [1, 1]} : vector<128x128xbf16> to vector<128x32xbf16>
    %cst_9 = arith.constant dense<0.000000e+00> : vector<128x128xf32>
    %34 = tpu.matmul %31, %32, %cst_9 {dimension_numbers = #tpu.dot_dimension_numbers<[1], [1], [0], [0], [0, 0, 1, 0], [], []>} : vector<128x32xbf16>, vector<128x32xbf16>, vector<128x128xf32> -> vector<128x128xf32>
    %cst_10 = arith.constant -1.000000e+30 : f32
    %35 = vector.broadcast %cst_10 : f32 to vector<128x128xf32>
    %36 = arith.select %12, %34, %35 : vector<128x128xi1>, vector<128x128xf32>
    %cst_11 = arith.constant dense<0xFF800000> : vector<128xf32>
    %37 = vector.multi_reduction <maximumf>, %36, %cst_11 [1] : vector<128x128xf32> to vector<128xf32>
    %38 = vector.shape_cast %37 : vector<128xf32> to vector<128x1xf32>
    %39 = vector.broadcast %38 : vector<128x1xf32> to vector<128x128xf32>
    %40 = arith.subf %36, %39 : vector<128x128xf32>
    %41 = math.exp %40 : vector<128x128xf32>
    %cst_12 = arith.constant dense<0.000000e+00> : vector<128xf32>
    %42 = vector.multi_reduction <add>, %41, %cst_12 [1] : vector<128x128xf32> to vector<128xf32>
    %43 = vector.shape_cast %42 : vector<128xf32> to vector<128x1xf32>
    %44 = tpu.reciprocal %43 {approx = true} : vector<128x1xf32> -> vector<128x1xf32>
    %45 = vector.broadcast %44 : vector<128x1xf32> to vector<128x128xf32>
    %46 = arith.mulf %41, %45 : vector<128x128xf32>
    %47 = arith.truncf %46 : vector<128x128xf32> to vector<128x128xbf16>
    %cst_13 = arith.constant dense<0.000000e+00> : vector<128x32xf32>
    %48 = tpu.matmul %47, %33, %cst_13 {dimension_numbers = #tpu.dot_dimension_numbers<[1], [0], [0], [1], [0, 0, 1, 1], [], []>} : vector<128x128xbf16>, vector<128x32xbf16>, vector<128x32xf32> -> vector<128x32xf32>
    %49 = vector.extract_strided_slice %5 {offsets = [0, 64], sizes = [128, 32], strides = [1, 1]} : vector<128x128xbf16> to vector<128x32xbf16>
    %50 = vector.extract_strided_slice %7 {offsets = [0, 64], sizes = [128, 32], strides = [1, 1]} : vector<128x128xbf16> to vector<128x32xbf16>
    %51 = vector.extract_strided_slice %9 {offsets = [0, 64], sizes = [128, 32], strides = [1, 1]} : vector<128x128xbf16> to vector<128x32xbf16>
    %cst_14 = arith.constant dense<0.000000e+00> : vector<128x128xf32>
    %52 = tpu.matmul %49, %50, %cst_14 {dimension_numbers = #tpu.dot_dimension_numbers<[1], [1], [0], [0], [0, 0, 1, 0], [], []>} : vector<128x32xbf16>, vector<128x32xbf16>, vector<128x128xf32> -> vector<128x128xf32>
    %cst_15 = arith.constant -1.000000e+30 : f32
    %53 = vector.broadcast %cst_15 : f32 to vector<128x128xf32>
    %54 = arith.select %12, %52, %53 : vector<128x128xi1>, vector<128x128xf32>
    %cst_16 = arith.constant dense<0xFF800000> : vector<128xf32>
    %55 = vector.multi_reduction <maximumf>, %54, %cst_16 [1] : vector<128x128xf32> to vector<128xf32>
    %56 = vector.shape_cast %55 : vector<128xf32> to vector<128x1xf32>
    %57 = vector.broadcast %56 : vector<128x1xf32> to vector<128x128xf32>
    %58 = arith.subf %54, %57 : vector<128x128xf32>
    %59 = math.exp %58 : vector<128x128xf32>
    %cst_17 = arith.constant dense<0.000000e+00> : vector<128xf32>
    %60 = vector.multi_reduction <add>, %59, %cst_17 [1] : vector<128x128xf32> to vector<128xf32>
    %61 = vector.shape_cast %60 : vector<128xf32> to vector<128x1xf32>
    %62 = tpu.reciprocal %61 {approx = true} : vector<128x1xf32> -> vector<128x1xf32>
    %63 = vector.broadcast %62 : vector<128x1xf32> to vector<128x128xf32>
    %64 = arith.mulf %59, %63 : vector<128x128xf32>
    %65 = arith.truncf %64 : vector<128x128xf32> to vector<128x128xbf16>
    %cst_18 = arith.constant dense<0.000000e+00> : vector<128x32xf32>
    %66 = tpu.matmul %65, %51, %cst_18 {dimension_numbers = #tpu.dot_dimension_numbers<[1], [0], [0], [1], [0, 0, 1, 1], [], []>} : vector<128x128xbf16>, vector<128x32xbf16>, vector<128x32xf32> -> vector<128x32xf32>
    %67 = vector.extract_strided_slice %5 {offsets = [0, 96], sizes = [128, 32], strides = [1, 1]} : vector<128x128xbf16> to vector<128x32xbf16>
    %68 = vector.extract_strided_slice %7 {offsets = [0, 96], sizes = [128, 32], strides = [1, 1]} : vector<128x128xbf16> to vector<128x32xbf16>
    %69 = vector.extract_strided_slice %9 {offsets = [0, 96], sizes = [128, 32], strides = [1, 1]} : vector<128x128xbf16> to vector<128x32xbf16>
    %cst_19 = arith.constant dense<0.000000e+00> : vector<128x128xf32>
    %70 = tpu.matmul %67, %68, %cst_19 {dimension_numbers = #tpu.dot_dimension_numbers<[1], [1], [0], [0], [0, 0, 1, 0], [], []>} : vector<128x32xbf16>, vector<128x32xbf16>, vector<128x128xf32> -> vector<128x128xf32>
    %cst_20 = arith.constant -1.000000e+30 : f32
    %71 = vector.broadcast %cst_20 : f32 to vector<128x128xf32>
    %72 = arith.select %12, %70, %71 : vector<128x128xi1>, vector<128x128xf32>
    %cst_21 = arith.constant dense<0xFF800000> : vector<128xf32>
    %73 = vector.multi_reduction <maximumf>, %72, %cst_21 [1] : vector<128x128xf32> to vector<128xf32>
    %74 = vector.shape_cast %73 : vector<128xf32> to vector<128x1xf32>
    %75 = vector.broadcast %74 : vector<128x1xf32> to vector<128x128xf32>
    %76 = arith.subf %72, %75 : vector<128x128xf32>
    %77 = math.exp %76 : vector<128x128xf32>
    %cst_22 = arith.constant dense<0.000000e+00> : vector<128xf32>
    %78 = vector.multi_reduction <add>, %77, %cst_22 [1] : vector<128x128xf32> to vector<128xf32>
    %79 = vector.shape_cast %78 : vector<128xf32> to vector<128x1xf32>
    %80 = tpu.reciprocal %79 {approx = true} : vector<128x1xf32> -> vector<128x1xf32>
    %81 = vector.broadcast %80 : vector<128x1xf32> to vector<128x128xf32>
    %82 = arith.mulf %77, %81 : vector<128x128xf32>
    %83 = arith.truncf %82 : vector<128x128xf32> to vector<128x128xbf16>
    %cst_23 = arith.constant dense<0.000000e+00> : vector<128x32xf32>
    %84 = tpu.matmul %83, %69, %cst_23 {dimension_numbers = #tpu.dot_dimension_numbers<[1], [0], [0], [1], [0, 0, 1, 1], [], []>} : vector<128x128xbf16>, vector<128x32xbf16>, vector<128x32xf32> -> vector<128x32xf32>
    %85 = tpu.concatenate %30, %48, %66, %84 in 1 : vector<128x32xf32>, vector<128x32xf32>, vector<128x32xf32>, vector<128x32xf32> -> vector<128x128xf32>
    %86 = arith.truncf %85 : vector<128x128xf32> to vector<128x128xbf16>
    %c0_24 = arith.constant 0 : index
    %c0_25 = arith.constant 0 : index
    %87 = vector.load %arg3[%c0_24, %c0_25] : memref<128x128xbf16, #tpu.memory_space<vmem>>, vector<128x128xbf16>
    %cst_26 = arith.constant dense<0.000000e+00> : vector<128x128xf32>
    %88 = tpu.matmul %86, %87, %cst_26 {dimension_numbers = #tpu.dot_dimension_numbers<[1], [0], [0], [1], [0, 0, 1, 1], [], []>} : vector<128x128xbf16>, vector<128x128xbf16>, vector<128x128xf32> -> vector<128x128xf32>
    %c0_27 = arith.constant 0 : index
    %c0_28 = arith.constant 0 : index
    %89 = vector.load %arg4[%c0_27, %c0_28] : memref<1x128xf32, #tpu.memory_space<vmem>>, vector<1x128xf32>
    %90 = vector.broadcast %89 : vector<1x128xf32> to vector<128x128xf32>
    %91 = arith.addf %88, %90 : vector<128x128xf32>
    %c0_29 = arith.constant 0 : index
    %c0_30 = arith.constant 0 : index
    %c0_31 = arith.constant 0 : index
    %92 = vector.load %arg5[%c0_29, %c0_30, %c0_31] : memref<1x128x128xf32, #tpu.memory_space<vmem>>, vector<1x128x128xf32>
    %93 = vector.shape_cast %92 : vector<1x128x128xf32> to vector<128x128xf32>
    %94 = vector.shape_cast %91 : vector<128x128xf32> to vector<1x128x128xf32>
    tpu.vector_store %arg5[%c0_29, %c0_30, %c0_31], %94 {strides = array<i32>} : memref<1x128x128xf32, #tpu.memory_space<vmem>>, vector<1x128x128xf32>,
    return
  }
  func.func @transform_0(%arg0: i32) -> (i32, i32, i32) {
    %c0_i32 = arith.constant 0 : i32
    %c0_i32_0 = arith.constant 0 : i32
    %c0_i32_1 = arith.constant 0 : i32
    return %arg0, %c0_i32, %c0_i32_0 : i32, i32, i32
  }
  func.func @transform_1(%arg0: i32) -> (i32, i32) {
    %c0_i32 = arith.constant 0 : i32
    %c0_i32_0 = arith.constant 0 : i32
    %c0_i32_1 = arith.constant 0 : i32
    return %c0_i32, %c0_i32_0 : i32, i32
  }
  func.func @transform_2(%arg0: i32) -> (i32, i32) {
    %c0_i32 = arith.constant 0 : i32
    %c0_i32_0 = arith.constant 0 : i32
    %c0_i32_1 = arith.constant 0 : i32
    return %c0_i32, %c0_i32_0 : i32, i32
  }
  func.func @transform_3(%arg0: i32) -> (i32, i32) {
    %c0_i32 = arith.constant 0 : i32
    %c0_i32_0 = arith.constant 0 : i32
    %c0_i32_1 = arith.constant 0 : i32
    return %c0_i32, %c0_i32_0 : i32, i32
  }
  func.func @transform_4(%arg0: i32) -> (i32, i32, i32) {
    %c0_i32 = arith.constant 0 : i32
    %c0_i32_0 = arith.constant 0 : i32
    %c0_i32_1 = arith.constant 0 : i32
    return %arg0, %c0_i32, %c0_i32_0 : i32, i32, i32
  }
}

</mosaic_0001>

<llo_original>
// kernel: multi_head_attention.1
$region0: #{multi_head_attention.1}
  #allocation0 [shape = 'u32[]', space=smem, size = 0x4, offset = 0x4, fixed_abs, tag = 'smem constant byte address 0x4 - core index']
  #allocation1 [shape = 'u32[144,128]{1,0:T(1,128)}', space=vmem, size = 0x12000, scoped, tag = 'internal scratch']
  %s0 = inlined_call_operand.vmem [shape: bf16[2,128,128], index: 0, kind: input, shape index: {}]
  %s1 = inlined_call_operand.vmem [shape: bf16[128,384], index: 1, kind: input, shape index: {}]
  %s2 = inlined_call_operand.vmem [shape: bf16[128,128], index: 2, kind: input, shape index: {}]
  %s3 = inlined_call_operand.vmem [shape: f32[1,128], index: 3, kind: input, shape index: {}]
  %s4 = inlined_call_operand.hbm [shape: f32[2,128,128], index: 4, kind: output, shape index: {}]
  %s5 = sld [smem:[#allocation0]]
  $region49: #{multi_head_attention.1} parent=0
    _
  %s7 = ssub.s32 1, %s5
  %s8 = scalar_select 0, %s7, %s5
  $region1: #{multi_head_attention.1} parent=0
    #allocation2 [shape = 'u8[131072]{0}', space=vmem, size = 0x20000, scoped, tag = 'output window, operand 0']
    #allocation3 [shape = 's32[2]{0}', space=sflag, size = 0x8, scoped, tag = 'scoped memory for multi_head_attention.1']
    %9 = vsyncpa [#allocation3], 0
    %s10 = scalar_lea.sflag [#allocation3], 1
    %11 = vsyncpa %s10, 0
    loop: start=0, step=1, limit=4
    $region2: #{multi_head_attention.1} parent=1 // loop_pre_header
      _
    $region3: #{multi_head_attention.1} parent=1 // loop_header
      %s13 = sphi 0, %s17
      %p14 = scmp.ge.s32.totalorder %s13, 4
      %s23 = sphi 0, %s25
      %s26 = sphi 0, %s23
      %s27 = sphi 0, %s26
      %s43 = sphi 0, %s27
      %s47 = sphi 0, %s47
      %s49 = sphi 0, %s47
      %s50 = sphi 0, %s49
      %s64 = sphi 0, %s50
      %s68 = sphi 0, %s68
      %s70 = sphi 0, %s68
      %s71 = sphi 0, %s70
      %s85 = sphi 0, %s71
      %s89 = sphi 0, %s89
      %s91 = sphi 0, %s89
      %s92 = sphi 0, %s91
      %s106 = sphi 0, %s92
      %s112 = sphi 0, %s114
      %s115 = sphi 0, %s112
      %s116 = sphi 0, %s115
      %s132 = sphi 0, %s116
    $region4: #{multi_head_attention.1} parent=1 // loop_header_branch
      %16 = sbr.rel (%p14) target = $region8
    $region5: #{multi_head_attention.1} parent=1 // loop_body
      %s18 = ssub.s32 %s13, 1
      %s19 = ssub.s32 %s13, 2
      %s20 = sadd.s32 %s13, 1
      %s21 = ssub.s32 %s13, %s20
      %p22 = scmp.eq.s32.totalorder %s21, 0
      %s24 = sadd.s32 %s23, 1
      %s25 = scalar_select %p22, %s23, %s24
      %p28 = pneg %p22
      %p29 = scmp.eq.s32.totalorder %s13, 1
      %p30 = por %p28, %p29
      %p31 = scmp.ne.s32.totalorder %s23, %s26
      %p32 = scmp.eq.s32.totalorder %s13, 0
      %p33 = por %p31, %p32
      %p34 = scmp.ne.s32.totalorder %s23, %s26
      %p35 = scmp.eq.s32.totalorder %s18, 1
      %p36 = por %p34, %p35
      %p37 = scmp.ne.s32.totalorder %s26, %s27
      %p38 = scmp.eq.s32.totalorder %s18, 0
      %p39 = por %p37, %p38
      %p40 = scmp.ne.s32.totalorder %s26, %s27
      %p41 = scmp.eq.s32.totalorder %s19, 1
      %p42 = por %p40, %p41
      %p44 = scmp.ne.s32.totalorder %s27, %s43
      %p45 = scmp.eq.s32.totalorder %s19, 0
      %p46 = por %p44, %p45
      %s48 = sadd.s32 %s47, 1
      %p51 = scmp.eq.s32.totalorder %s13, 1
      %p52 = scmp.ne.s32.totalorder %s47, %s49
      %p53 = scmp.eq.s32.totalorder %s13, 0
      %p54 = por %p52, %p53
      %p55 = scmp.ne.s32.totalorder %s47, %s49
      %p56 = scmp.eq.s32.totalorder %s18, 1
      %p57 = por %p55, %p56
      %p58 = scmp.ne.s32.totalorder %s49, %s50
      %p59 = scmp.eq.s32.totalorder %s18, 0
      %p60 = por %p58, %p59
      %p61 = scmp.ne.s32.totalorder %s49, %s50
      %p62 = scmp.eq.s32.totalorder %s19, 1
      %p63 = por %p61, %p62
      %p65 = scmp.ne.s32.totalorder %s50, %s64
      %p66 = scmp.eq.s32.totalorder %s19, 0
      %p67 = por %p65, %p66
      %s69 = sadd.s32 %s68, 1
      %p72 = scmp.eq.s32.totalorder %s13, 1
      %p73 = scmp.ne.s32.totalorder %s68, %s70
      %p74 = scmp.eq.s32.totalorder %s13, 0
      %p75 = por %p73, %p74
      %p76 = scmp.ne.s32.totalorder %s68, %s70
      %p77 = scmp.eq.s32.totalorder %s18, 1
      %p78 = por %p76, %p77
      %p79 = scmp.ne.s32.totalorder %s70, %s71
      %p80 = scmp.eq.s32.totalorder %s18, 0
      %p81 = por %p79, %p80
      %p82 = scmp.ne.s32.totalorder %s70, %s71
      %p83 = scmp.eq.s32.totalorder %s19, 1
      %p84 = por %p82, %p83
      %p86 = scmp.ne.s32.totalorder %s71, %s85
      %p87 = scmp.eq.s32.totalorder %s19, 0
      %p88 = por %p86, %p87
      %s90 = sadd.s32 %s89, 1
      %p93 = scmp.eq.s32.totalorder %s13, 1
      %p94 = scmp.ne.s32.totalorder %s89, %s91
      %p95 = scmp.eq.s32.totalorder %s13, 0
      %p96 = por %p94, %p95
      %p97 = scmp.ne.s32.totalorder %s89, %s91
      %p98 = scmp.eq.s32.totalorder %s18, 1
      %p99 = por %p97, %p98
      %p100 = scmp.ne.s32.totalorder %s91, %s92
      %p101 = scmp.eq.s32.totalorder %s18, 0
      %p102 = por %p100, %p101
      %p103 = scmp.ne.s32.totalorder %s91, %s92
      %p104 = scmp.eq.s32.totalorder %s19, 1
      %p105 = por %p103, %p104
      %p107 = scmp.ne.s32.totalorder %s92, %s106
      %p108 = scmp.eq.s32.totalorder %s19, 0
      %p109 = por %p107, %p108
      %s110 = ssub.s32 %s13, %s20
      %p111 = scmp.eq.s32.totalorder %s110, 0
      %s113 = sadd.s32 %s112, 1
      %s114 = scalar_select %p111, %s112, %s113
      %p117 = pneg %p111
      %p118 = scmp.eq.s32.totalorder %s13, 1
      %p119 = por %p117, %p118
      %p120 = scmp.ne.s32.totalorder %s112, %s115
      %p121 = scmp.eq.s32.totalorder %s13, 0
      %p122 = por %p120, %p121
      %p123 = scmp.ne.s32.totalorder %s112, %s115
      %p124 = scmp.eq.s32.totalorder %s18, 1
      %p125 = por %p123, %p124
      %p126 = scmp.ne.s32.totalorder %s115, %s116
      %p127 = scmp.eq.s32.totalorder %s18, 0
      %p128 = por %p126, %p127
      %p129 = scmp.ne.s32.totalorder %s115, %s116
      %p130 = scmp.eq.s32.totalorder %s19, 1
      %p131 = por %p129, %p130
      %p133 = scmp.ne.s32.totalorder %s116, %s132
      %p134 = scmp.eq.s32.totalorder %s19, 0
      %p135 = por %p133, %p134
      %p136 = scmp.le.s32.totalorder 1, %s13
      %p137 = scmp.lt.s32.totalorder %s13, 3
      %p138 = pnand %p136, %p137
      %p139 = pneg %p138
      // Predicated region
      $region9: #{multi_head_attention.1} parent=5 // pred_check
        _
      $region10: #{multi_head_attention.1} parent=5 // pred_check_branch
        %141 = sbr.rel (%p138) target = $region12
      $region11: #{multi_head_attention.1} parent=5 // pred_region
        %s142 = ssub.s32 %s13, 1
        // Predicated region
        $region13: #{multi_head_attention.1} parent=11 // pred_check
          %p143 = pneg %p60
        $region14: #{multi_head_attention.1} parent=11 // pred_check_branch
          %145 = sbr.rel (%p143) target = $region16
        $region15: #{multi_head_attention.1} parent=11 // pred_region
          _
        $region16: #{multi_head_attention.1} parent=11 // pred_fallthru
          _
        // Predicated region
        $region17: #{multi_head_attention.1} parent=11 // pred_check
          %p146 = pneg %p81
        $region18: #{multi_head_attention.1} parent=11 // pred_check_branch
          %148 = sbr.rel (%p146) target = $region20
        $region19: #{multi_head_attention.1} parent=11 // pred_region
          _
        $region20: #{multi_head_attention.1} parent=11 // pred_fallthru
          _
        // Predicated region
        $region21: #{multi_head_attention.1} parent=11 // pred_check
          %p149 = pneg %p102
        $region22: #{multi_head_attention.1} parent=11 // pred_check_branch
          %151 = sbr.rel (%p149) target = $region24
        $region23: #{multi_head_attention.1} parent=11 // pred_region
          _
        $region24: #{multi_head_attention.1} parent=11 // pred_fallthru
          _
      $region12: #{multi_head_attention.1} parent=5 // pred_fallthru
        _
      %p152 = scmp.lt.s32.totalorder %s13, 2
      // Predicated region
      $region25: #{multi_head_attention.1} parent=5 // pred_check
        %p153 = pneg %p152
      $region26: #{multi_head_attention.1} parent=5 // pred_check_branch
        %155 = sbr.rel (%p153) target = $region28
      $region27: #{multi_head_attention.1} parent=5 // pred_region
        // Predicated region
        $region29: #{multi_head_attention.1} parent=27 // pred_check
          %p156 = pneg %p33
        $region30: #{multi_head_attention.1} parent=27 // pred_check_branch
          %158 = sbr.rel (%p156) target = $region32
        $region31: #{multi_head_attention.1} parent=27 // pred_region
          %p159 = scmp.lt.s32.totalorder %s13, 1
          %s160 = scalar_select %p159, %s13, 1
          %s161 = smul.addr %s160, 16
          %s162 = smul.addr %s161, 4
          %s163 = scalar_lea.vmem %s0, %s162
        $region32: #{multi_head_attention.1} parent=27 // pred_fallthru
          _
      $region28: #{multi_head_attention.1} parent=5 // pred_fallthru
        _
      %p164 = scmp.le.s32.totalorder 1, %s13
      %p165 = scmp.lt.s32.totalorder %s13, 3
      %p166 = pnand %p164, %p165
      %p167 = pneg %p166
      // Predicated region
      $region33: #{multi_head_attention.1} parent=5 // pred_check
        _
      $region34: #{multi_head_attention.1} parent=5 // pred_check_branch
        %169 = sbr.rel (%p166) target = $region36
      $region35: #{multi_head_attention.1} parent=5 // pred_region
        %s170 = ssub.s32 %s13, 1
        %p171 = scmp.lt.s32.totalorder %s18, 1
        %s172 = scalar_select %p171, %s18, 1
        %s173 = smul.addr %s172, 16
        %s174 = smul.addr %s173, 4
        %s175 = scalar_lea.vmem %s0, %s174
        %p176 = pneg %p39
        %p177 = pneg %p36
        %p178 = pneg %p60
        %p179 = pneg %p57
        %p180 = pneg %p81
        %p181 = pneg %p78
        %p182 = pneg %p102
        %p183 = pneg %p99
        %p184 = pneg %p128
        %p185 = pneg %p125
        %s186 = sand.u32 %s115, 1
        %s187 = scalar_lea.sflag [#allocation3], %s186
        %s188 = sand.u32 %s115, 1
        %s189 = smul.addr %s188, 128
        %s190 = scalar_lea.vmem [#allocation2], %s189
        %p191 = scmp.lt.s32.totalorder %s18, 1
        %s192 = scalar_select %p191, %s18, 1
        %s193 = smul.addr %s192, 16
        %s194 = smul.addr %s193, 4
        %s195 = scalar_lea.vmem %s0, %s194
        %v197 = vld [vmem:[%s195] sm:$0xf]
        %v198 = vld [vmem:[%s195 + $0x4] sm:$0xf]
        %v199 = vld [vmem:[%s195 + $0x8] sm:$0xf]
        %v200 = vld [vmem:[%s195 + $0xc] sm:$0xf]
        %v201 = vld [vmem:[%s195 + $0x10] sm:$0xf]
        %v202 = vld [vmem:[%s195 + $0x14] sm:$0xf]
        %v203 = vld [vmem:[%s195 + $0x18] sm:$0xf]
        %v204 = vld [vmem:[%s195 + $0x1c] sm:$0xf]
        %v205 = vld [vmem:[%s195 + $0x20] sm:$0xf]
        %v206 = vld [vmem:[%s195 + $0x24] sm:$0xf]
        %v207 = vld [vmem:[%s195 + $0x28] sm:$0xf]
        %v208 = vld [vmem:[%s195 + $0x2c] sm:$0xf]
        %v209 = vld [vmem:[%s195 + $0x30] sm:$0xf]
        %v210 = vld [vmem:[%s195 + $0x34] sm:$0xf]
        %v211 = vld [vmem:[%s195 + $0x38] sm:$0xf]
        %v212 = vld [vmem:[%s195 + $0x3c] sm:$0xf]
        %v213 = vld [vmem:[%s1] sm:$0xff]
        %v214 = vld [vmem:[%s1 + $0x8] sm:$0xf]
        %v215 = vld [vmem:[%s1 + $0xc] sm:$0xff]
        %v216 = vld [vmem:[%s1 + $0x14] sm:$0xf]
        %v217 = vld [vmem:[%s1 + $0x18] sm:$0xff]
        %v218 = vld [vmem:[%s1 + $0x20] sm:$0xf]
        %v219 = vld [vmem:[%s1 + $0x24] sm:$0xff]
        %v220 = vld [vmem:[%s1 + $0x2c] sm:$0xf]
        %v221 = vld [vmem:[%s1 + $0x30] sm:$0xff]
        %v222 = vld [vmem:[%s1 + $0x38] sm:$0xf]
        %v223 = vld [vmem:[%s1 + $0x3c] sm:$0xff]
        %v224 = vld [vmem:[%s1 + $0x44] sm:$0xf]
        %v225 = vld [vmem:[%s1 + $0x48] sm:$0xff]
        %v226 = vld [vmem:[%s1 + $0x50] sm:$0xf]
        %v227 = vld [vmem:[%s1 + $0x54] sm:$0xff]
        %v228 = vld [vmem:[%s1 + $0x5c] sm:$0xf]
        %v229 = vld [vmem:[%s1 + $0x60] sm:$0xff]
        %v230 = vld [vmem:[%s1 + $0x68] sm:$0xf]
        %v231 = vld [vmem:[%s1 + $0x6c] sm:$0xff]
        %v232 = vld [vmem:[%s1 + $0x74] sm:$0xf]
        %v233 = vld [vmem:[%s1 + $0x78] sm:$0xff]
        %v234 = vld [vmem:[%s1 + $0x80] sm:$0xf]
        %v235 = vld [vmem:[%s1 + $0x84] sm:$0xff]
        %v236 = vld [vmem:[%s1 + $0x8c] sm:$0xf]
        %v237 = vld [vmem:[%s1 + $0x90] sm:$0xff]
        %v238 = vld [vmem:[%s1 + $0x98] sm:$0xf]
        %v239 = vld [vmem:[%s1 + $0x9c] sm:$0xff]
        %v240 = vld [vmem:[%s1 + $0xa4] sm:$0xf]
        %v241 = vld [vmem:[%s1 + $0xa8] sm:$0xff]
        %v242 = vld [vmem:[%s1 + $0xb0] sm:$0xf]
        %v243 = vld [vmem:[%s1 + $0xb4] sm:$0xff]
        %v244 = vld [vmem:[%s1 + $0xbc] sm:$0xf]
        %v261 = vunpack.c.l.b16 %v197
        %v262 = vunpack.c.l.b16 %v198
        %v263 = vunpack.c.l.b16 %v199
        %v264 = vunpack.c.l.b16 %v200
        %v265 = vunpack.c.l.b16 %v201
        %v266 = vunpack.c.l.b16 %v202
        %v267 = vunpack.c.l.b16 %v203
        %v268 = vunpack.c.l.b16 %v204
        %v269 = vunpack.c.l.b16 %v205
        %v270 = vunpack.c.l.b16 %v206
        %v271 = vunpack.c.l.b16 %v207
        %v272 = vunpack.c.l.b16 %v208
        %v273 = vunpack.c.l.b16 %v209
        %v274 = vunpack.c.l.b16 %v210
        %v275 = vunpack.c.l.b16 %v211
        %v276 = vunpack.c.l.b16 %v212
        %v277 = vpack.c.b16 %v262, %v261
        %v278 = vpack.c.b16 %v264, %v263
        %v279 = vpack.c.b16 %v266, %v265
        %v280 = vpack.c.b16 %v268, %v267
        %v281 = vpack.c.b16 %v270, %v269
        %v282 = vpack.c.b16 %v272, %v271
        %v283 = vpack.c.b16 %v274, %v273
        %v284 = vpack.c.b16 %v276, %v275
        %v325 = vunpack.c.l.b16 %v213
        %v326 = vunpack.c.h.b16 %v213
        %v327 = vunpack.c.l.b16 %v214
        %v328 = vunpack.c.l.b16 %v215
        %v329 = vunpack.c.h.b16 %v215
        %v330 = vunpack.c.l.b16 %v216
        %v331 = vunpack.c.l.b16 %v217
        %v332 = vunpack.c.h.b16 %v217
        %v333 = vunpack.c.l.b16 %v218
        %v334 = vunpack.c.l.b16 %v219
        %v335 = vunpack.c.h.b16 %v219
        %v336 = vunpack.c.l.b16 %v220
        %v337 = vunpack.c.l.b16 %v221
        %v338 = vunpack.c.h.b16 %v221
        %v339 = vunpack.c.l.b16 %v222
        %v340 = vunpack.c.l.b16 %v223
        %v341 = vunpack.c.h.b16 %v223
        %v342 = vunpack.c.l.b16 %v224
        %v343 = vunpack.c.l.b16 %v225
        %v344 = vunpack.c.h.b16 %v225
        %v345 = vunpack.c.l.b16 %v226
        %v346 = vunpack.c.l.b16 %v227
        %v347 = vunpack.c.h.b16 %v227
        %v348 = vunpack.c.l.b16 %v228
        %v349 = vunpack.c.l.b16 %v229
        %v350 = vunpack.c.h.b16 %v229
        %v351 = vunpack.c.l.b16 %v230
        %v352 = vunpack.c.l.b16 %v231
        %v353 = vunpack.c.h.b16 %v231
        %v354 = vunpack.c.l.b16 %v232
        %v355 = vunpack.c.l.b16 %v233
        %v356 = vunpack.c.h.b16 %v233
        %v357 = vunpack.c.l.b16 %v234
        %v358 = vunpack.c.l.b16 %v235
        %v359 = vunpack.c.h.b16 %v235
        %v360 = vunpack.c.l.b16 %v236
        %v361 = vunpack.c.l.b16 %v237
        %v362 = vunpack.c.h.b16 %v237
        %v363 = vunpack.c.l.b16 %v238
        %v364 = vunpack.c.l.b16 %v239
        %v365 = vunpack.c.h.b16 %v239
        %v366 = vunpack.c.l.b16 %v240
        %v367 = vunpack.c.l.b16 %v241
        %v368 = vunpack.c.h.b16 %v241
        %v369 = vunpack.c.l.b16 %v242
        %v370 = vunpack.c.l.b16 %v243
        %v371 = vunpack.c.h.b16 %v243
        %v372 = vunpack.c.l.b16 %v244
        %v373 = vpack.c.b16 %v328, %v325
        %v374 = vpack.c.b16 %v329, %v326
        %v375 = vpack.c.b16 %v330, %v327
        %v376 = vpack.c.b16 %v334, %v331
        %v377 = vpack.c.b16 %v335, %v332
        %v378 = vpack.c.b16 %v336, %v333
        %v379 = vpack.c.b16 %v340, %v337
        %v380 = vpack.c.b16 %v341, %v338
        %v381 = vpack.c.b16 %v342, %v339
        %v382 = vpack.c.b16 %v346, %v343
        %v383 = vpack.c.b16 %v347, %v344
        %v384 = vpack.c.b16 %v348, %v345
        %v385 = vpack.c.b16 %v352, %v349
        %v386 = vpack.c.b16 %v353, %v350
        %v387 = vpack.c.b16 %v354, %v351
        %v388 = vpack.c.b16 %v358, %v355
        %v389 = vpack.c.b16 %v359, %v356
        %v390 = vpack.c.b16 %v360, %v357
        %v391 = vpack.c.b16 %v364, %v361
        %v392 = vpack.c.b16 %v365, %v362
        %v393 = vpack.c.b16 %v366, %v363
        %v394 = vpack.c.b16 %v370, %v367
        %v395 = vpack.c.b16 %v371, %v368
        %v396 = vpack.c.b16 %v372, %v369
        %421 = vmatprep.subr.bf16.mxu0 %v374
        %422 = vmatpush1.bf16.msra.mxu0 %v373
        %423 = vmatprep.subr.bf16.mxu0 %v377
        %424 = vmatpush1.bf16.msra.mxu0 %v376
        %425 = vmatprep.subr.bf16.mxu0 %v380
        %426 = vmatpush1.bf16.msra.mxu0 %v379
        %427 = vmatprep.subr.bf16.mxu0 %v383
        %428 = vmatpush1.bf16.msra.mxu0 %v382
        %429 = vmatprep.subr.bf16.mxu0 %v386
        %430 = vmatpush1.bf16.msra.mxu0 %v385
        %431 = vmatprep.subr.bf16.mxu0 %v389
        %432 = vmatpush1.bf16.msra.mxu0 %v388
        %433 = vmatprep.subr.bf16.mxu0 %v392
        %434 = vmatpush1.bf16.msra.mxu0 %v391
        %435 = vmatprep.subr.bf16.mxu0 %v395
        %436 = vmatpush1.bf16.msra.mxu0 %v394
        %437 = vmatprep.subr.bf16.mxu0 0
        %438 = vmatpush1.bf16.msra.mxu0 0
        %439 = vmatprep.subr.bf16.mxu0 0
        %440 = vmatpush1.bf16.msra.mxu0 0
        %441 = vmatprep.subr.bf16.mxu0 0
        %442 = vmatpush1.bf16.msra.mxu0 0
        %443 = vmatprep.subr.bf16.mxu0 0
        %444 = vmatpush1.bf16.msra.mxu0 0
        %445 = vmatprep.subr.bf16.mxu0 0
        %446 = vmatpush1.bf16.msra.mxu0 0
        %447 = vmatprep.subr.bf16.mxu0 0
        %448 = vmatpush1.bf16.msra.mxu0 0
        %449 = vmatprep.subr.bf16.mxu0 0
        %450 = vmatpush1.bf16.msra.mxu0 0
        %451 = vmatprep.subr.bf16.mxu0 0
        %452 = vmatpush1.bf16.msra.mxu0 0
        %453 = vmatprep.mubr.bf16.mxu0 0
        %454 = vmatmul.mubr.bf16.gmra.mrb[0].mxu0 %v277
        %v455 = vpop.f32.mrb[0].mxu0
        %v456 = vadd.f32 0.0, %v455
        %v457 = vpop.f32.mrb[0].mxu0
        %v458 = vadd.f32 0.0, %v457
        %v459 = vpop.f32.mrb[0].mxu0
        %v460 = vadd.f32 0.0, %v459
        %v461 = vpop.f32.mrb[0].mxu0
        %v462 = vadd.f32 0.0, %v461
        %463 = vmatprep.mubr.bf16.mxu0 0
        %464 = vmatmul.mubr.bf16.gmra.mrb[0].mxu0 %v278
        %v465 = vpop.f32.mrb[0].mxu0
        %v466 = vadd.f32 0.0, %v465
        %v467 = vpop.f32.mrb[0].mxu0
        %v468 = vadd.f32 0.0, %v467
        %v469 = vpop.f32.mrb[0].mxu0
        %v470 = vadd.f32 0.0, %v469
        %v471 = vpop.f32.mrb[0].mxu0
        %v472 = vadd.f32 0.0, %v471
        %473 = vmatprep.mubr.bf16.mxu0 0
        %474 = vmatmul.mubr.bf16.gmra.mrb[0].mxu0 %v279
        %v475 = vpop.f32.mrb[0].mxu0
        %v476 = vadd.f32 0.0, %v475
        %v477 = vpop.f32.mrb[0].mxu0
        %v478 = vadd.f32 0.0, %v477
        %v479 = vpop.f32.mrb[0].mxu0
        %v480 = vadd.f32 0.0, %v479
        %v481 = vpop.f32.mrb[0].mxu0
        %v482 = vadd.f32 0.0, %v481
        %483 = vmatprep.mubr.bf16.mxu0 0
        %484 = vmatmul.mubr.bf16.gmra.mrb[0].mxu0 %v280
        %v485 = vpop.f32.mrb[0].mxu0
        %v486 = vadd.f32 0.0, %v485
        %v487 = vpop.f32.mrb[0].mxu0
        %v488 = vadd.f32 0.0, %v487
        %v489 = vpop.f32.mrb[0].mxu0
        %v490 = vadd.f32 0.0, %v489
        %v491 = vpop.f32.mrb[0].mxu0
        %v492 = vadd.f32 0.0, %v491
        %493 = vmatprep.mubr.bf16.mxu0 0
        %494 = vmatmul.mubr.bf16.gmra.mrb[0].mxu0 %v281
        %v495 = vpop.f32.mrb[0].mxu0
        %v496 = vadd.f32 0.0, %v495
        %v497 = vpop.f32.mrb[0].mxu0
        %v498 = vadd.f32 0.0, %v497
        %v499 = vpop.f32.mrb[0].mxu0
        %v500 = vadd.f32 0.0, %v499
        %v501 = vpop.f32.mrb[0].mxu0
        %v502 = vadd.f32 0.0, %v501
        %503 = vmatprep.mubr.bf16.mxu0 0
        %504 = vmatmul.mubr.bf16.gmra.mrb[0].mxu0 %v282
        %v505 = vpop.f32.mrb[0].mxu0
        %v506 = vadd.f32 0.0, %v505
        %v507 = vpop.f32.mrb[0].mxu0
        %v508 = vadd.f32 0.0, %v507
        %v509 = vpop.f32.mrb[0].mxu0
        %v510 = vadd.f32 0.0, %v509
        %v511 = vpop.f32.mrb[0].mxu0
        %v512 = vadd.f32 0.0, %v511
        %513 = vmatprep.mubr.bf16.mxu0 0
        %514 = vmatmul.mubr.bf16.gmra.mrb[0].mxu0 %v283
        %v515 = vpop.f32.mrb[0].mxu0
        %v516 = vadd.f32 0.0, %v515
        %v517 = vpop.f32.mrb[0].mxu0
        %v518 = vadd.f32 0.0, %v517
        %v519 = vpop.f32.mrb[0].mxu0
        %v520 = vadd.f32 0.0, %v519
        %v521 = vpop.f32.mrb[0].mxu0
        %v522 = vadd.f32 0.0, %v521
        %523 = vmatprep.mubr.bf16.mxu0 0
        %524 = vmatmul.mubr.bf16.gmra.mrb[0].mxu0 %v284
        %v525 = vpop.f32.mrb[0].mxu0
        %v526 = vadd.f32 0.0, %v525
        %v527 = vpop.f32.mrb[0].mxu0
        %v528 = vadd.f32 0.0, %v527
        %v529 = vpop.f32.mrb[0].mxu0
        %v530 = vadd.f32 0.0, %v529
        %v531 = vpop.f32.mrb[0].mxu0
        %v532 = vadd.f32 0.0, %v531
        %533 = vdwg.mxu0
        %534 = vmatprep.subr.bf16.mxu0 0
        %535 = vmatpush1.bf16.msra.mxu0 %v375
        %536 = vmatprep.subr.bf16.mxu0 0
        %537 = vmatpush1.bf16.msra.mxu0 %v378
        %538 = vmatprep.subr.bf16.mxu0 0
        %539 = vmatpush1.bf16.msra.mxu0 %v381
        %540 = vmatprep.subr.bf16.mxu0 0
        %541 = vmatpush1.bf16.msra.mxu0 %v384
        %542 = vmatprep.subr.bf16.mxu0 0
        %543 = vmatpush1.bf16.msra.mxu0 %v387
        %544 = vmatprep.subr.bf16.mxu0 0
        %545 = vmatpush1.bf16.msra.mxu0 %v390
        %546 = vmatprep.subr.bf16.mxu0 0
        %547 = vmatpush1.bf16.msra.mxu0 %v393
        %548 = vmatprep.subr.bf16.mxu0 0
        %549 = vmatpush1.bf16.msra.mxu0 %v396
        %550 = vmatprep.subr.bf16.mxu0 0
        %551 = vmatpush1.bf16.msra.mxu0 0
        %552 = vmatprep.subr.bf16.mxu0 0
        %553 = vmatpush1.bf16.msra.mxu0 0
        %554 = vmatprep.subr.bf16.mxu0 0
        %555 = vmatpush1.bf16.msra.mxu0 0
        %556 = vmatprep.subr.bf16.mxu0 0
        %557 = vmatpush1.bf16.msra.mxu0 0
        %558 = vmatprep.subr.bf16.mxu0 0
        %559 = vmatpush1.bf16.msra.mxu0 0
        %560 = vmatprep.subr.bf16.mxu0 0
        %561 = vmatpush1.bf16.msra.mxu0 0
        %562 = vmatprep.subr.bf16.mxu0 0
        %563 = vmatpush1.bf16.msra.mxu0 0
        %564 = vmatprep.subr.bf16.mxu0 0
        %565 = vmatpush1.bf16.msra.mxu0 0
        %566 = vmatprep.mubr.bf16.mxu0 0
        %567 = vmatmul.mubr.bf16.gmra.mrb[0].mxu0 %v277
        %v568 = vpop.f32.mrb[0].mxu0
        %v569 = vadd.f32 0.0, %v568
        %v570 = vpop.f32.mrb[0].mxu0
        %v571 = vpop.f32.mrb[0].mxu0
        %v572 = vadd.f32 0.0, %v571
        %v573 = vpop.f32.mrb[0].mxu0
        %574 = vmatprep.mubr.bf16.mxu0 0
        %575 = vmatmul.mubr.bf16.gmra.mrb[0].mxu0 %v278
        %v576 = vpop.f32.mrb[0].mxu0
        %v577 = vadd.f32 0.0, %v576
        %v578 = vpop.f32.mrb[0].mxu0
        %v579 = vpop.f32.mrb[0].mxu0
        %v580 = vadd.f32 0.0, %v579
        %v581 = vpop.f32.mrb[0].mxu0
        %582 = vmatprep.mubr.bf16.mxu0 0
        %583 = vmatmul.mubr.bf16.gmra.mrb[0].mxu0 %v279
        %v584 = vpop.f32.mrb[0].mxu0
        %v585 = vadd.f32 0.0, %v584
        %v586 = vpop.f32.mrb[0].mxu0
        %v587 = vpop.f32.mrb[0].mxu0
        %v588 = vadd.f32 0.0, %v587
        %v589 = vpop.f32.mrb[0].mxu0
        %590 = vmatprep.mubr.bf16.mxu0 0
        %591 = vmatmul.mubr.bf16.gmra.mrb[0].mxu0 %v280
        %v592 = vpop.f32.mrb[0].mxu0
        %v593 = vadd.f32 0.0, %v592
        %v594 = vpop.f32.mrb[0].mxu0
        %v595 = vpop.f32.mrb[0].mxu0
        %v596 = vadd.f32 0.0, %v595
        %v597 = vpop.f32.mrb[0].mxu0
        %598 = vmatprep.mubr.bf16.mxu0 0
        %599 = vmatmul.mubr.bf16.gmra.mrb[0].mxu0 %v281
        %v600 = vpop.f32.mrb[0].mxu0
        %v601 = vadd.f32 0.0, %v600
        %v602 = vpop.f32.mrb[0].mxu0
        %v603 = vpop.f32.mrb[0].mxu0
        %v604 = vadd.f32 0.0, %v603
        %v605 = vpop.f32.mrb[0].mxu0
        %606 = vmatprep.mubr.bf16.mxu0 0
        %607 = vmatmul.mubr.bf16.gmra.mrb[0].mxu0 %v282
        %v608 = vpop.f32.mrb[0].mxu0
        %v609 = vadd.f32 0.0, %v608
        %v610 = vpop.f32.mrb[0].mxu0
        %v611 = vpop.f32.mrb[0].mxu0
        %v612 = vadd.f32 0.0, %v611
        %v613 = vpop.f32.mrb[0].mxu0
        %614 = vmatprep.mubr.bf16.mxu0 0
        %615 = vmatmul.mubr.bf16.gmra.mrb[0].mxu0 %v283
        %v616 = vpop.f32.mrb[0].mxu0
        %v617 = vadd.f32 0.0, %v616
        %v618 = vpop.f32.mrb[0].mxu0
        %v619 = vpop.f32.mrb[0].mxu0
        %v620 = vadd.f32 0.0, %v619
        %v621 = vpop.f32.mrb[0].mxu0
        %622 = vmatprep.mubr.bf16.mxu0 0
        %623 = vmatmul.mubr.bf16.gmra.mrb[0].mxu0 %v284
        %v624 = vpop.f32.mrb[0].mxu0
        %v625 = vadd.f32 0.0, %v624
        %v626 = vpop.f32.mrb[0].mxu0
        %v627 = vpop.f32.mrb[0].mxu0
        %v628 = vadd.f32 0.0, %v627
        %v629 = vpop.f32.mrb[0].mxu0
        %630 = vdwg.mxu0
        %v631 = vpack.c.bf16 %v460, %v456
        %v632 = vpack.c.bf16 %v470, %v466
        %v633 = vpack.c.bf16 %v480, %v476
        %v634 = vpack.c.bf16 %v490, %v486
        %v635 = vpack.c.bf16 %v500, %v496
        %v636 = vpack.c.bf16 %v510, %v506
        %v637 = vpack.c.bf16 %v520, %v516
        %v638 = vpack.c.bf16 %v530, %v526
        %v639 = vpack.c.bf16 %v462, %v458
        %v640 = vpack.c.bf16 %v472, %v468
        %v641 = vpack.c.bf16 %v482, %v478
        %v642 = vpack.c.bf16 %v492, %v488
        %v643 = vpack.c.bf16 %v502, %v498
        %v644 = vpack.c.bf16 %v512, %v508
        %v645 = vpack.c.bf16 %v522, %v518
        %v646 = vpack.c.bf16 %v532, %v528
        %v647 = vpack.c.bf16 %v572, %v569
        %v648 = vpack.c.bf16 %v580, %v577
        %v649 = vpack.c.bf16 %v588, %v585
        %v650 = vpack.c.bf16 %v596, %v593
        %v651 = vpack.c.bf16 %v604, %v601
        %v652 = vpack.c.bf16 %v612, %v609
        %v653 = vpack.c.bf16 %v620, %v617
        %v654 = vpack.c.bf16 %v628, %v625
        %v655 = vlaneseq
        %v656 = vshrl.u32 %v655, 7
        %v657 = vadd.s32 %v656, 8
        %v658 = vadd.s32 %v656, 16
        %v659 = vadd.s32 %v656, 24
        %v660 = vadd.s32 %v656, 32
        %v661 = vadd.s32 %v656, 40
        %v662 = vadd.s32 %v656, 48
        %v663 = vadd.s32 %v656, 56
        %v664 = vadd.s32 %v656, 64
        %v665 = vadd.s32 %v656, 72
        %v666 = vadd.s32 %v656, 80
        %v667 = vadd.s32 %v656, 88
        %v668 = vadd.s32 %v656, 96
        %v669 = vadd.s32 %v656, 104
        %v670 = vadd.s32 %v656, 112
        %v671 = vadd.s32 %v656, 120
        %v672 = vlaneseq
        %v673 = vand.u32 %v672, 127
        %vm674 = vcmp.ge.s32.totalorder %v656, %v673
        %vm675 = vcmp.ge.s32.totalorder %v657, %v673
        %vm676 = vcmp.ge.s32.totalorder %v658, %v673
        %vm677 = vcmp.ge.s32.totalorder %v659, %v673
        %vm678 = vcmp.ge.s32.totalorder %v660, %v673
        %vm679 = vcmp.ge.s32.totalorder %v661, %v673
        %vm680 = vcmp.ge.s32.totalorder %v662, %v673
        %vm681 = vcmp.ge.s32.totalorder %v663, %v673
        %vm682 = vcmp.ge.s32.totalorder %v664, %v673
        %vm683 = vcmp.ge.s32.totalorder %v665, %v673
        %vm684 = vcmp.ge.s32.totalorder %v666, %v673
        %vm685 = vcmp.ge.s32.totalorder %v667, %v673
        %vm686 = vcmp.ge.s32.totalorder %v668, %v673
        %vm687 = vcmp.ge.s32.totalorder %v669, %v673
        %vm688 = vcmp.ge.s32.totalorder %v670, %v673
        %vm689 = vcmp.ge.s32.totalorder %v671, %v673
        %vm690 = vcmask 261120
        %v692 = vsel %vm690, %v631, 0
        %v695 = vsel %vm690, %v632, 0
        %v698 = vsel %vm690, %v633, 0
        %v701 = vsel %vm690, %v634, 0
        %v704 = vsel %vm690, %v635, 0
        %v707 = vsel %vm690, %v636, 0
        %v710 = vsel %vm690, %v637, 0
        %v713 = vsel %vm690, %v638, 0
        %v716 = vsel %vm690, %v639, 0
        %v719 = vsel %vm690, %v640, 0
        %v722 = vsel %vm690, %v641, 0
        %v725 = vsel %vm690, %v642, 0
        %v728 = vsel %vm690, %v643, 0
        %v731 = vsel %vm690, %v644, 0
        %v734 = vsel %vm690, %v645, 0
        %v737 = vsel %vm690, %v646, 0
        %739 = vmatprep.subr.bf16.mxu0 0
        %740 = vmatpush1.bf16.xpose.msra.mxu0 %v716
        %741 = vmatprep.subr.bf16.mxu0 0
        %742 = vmatpush1.bf16.xpose.msra.mxu0 %v719
        %743 = vmatprep.subr.bf16.mxu0 0
        %744 = vmatpush1.bf16.xpose.msra.mxu0 %v722
        %745 = vmatprep.subr.bf16.mxu0 0
        %746 = vmatpush1.bf16.xpose.msra.mxu0 %v725
        %747 = vmatprep.subr.bf16.mxu0 0
        %748 = vmatpush1.bf16.xpose.msra.mxu0 %v728
        %749 = vmatprep.subr.bf16.mxu0 0
        %750 = vmatpush1.bf16.xpose.msra.mxu0 %v731
        %751 = vmatprep.subr.bf16.mxu0 0
        %752 = vmatpush1.bf16.xpose.msra.mxu0 %v734
        %753 = vmatprep.subr.bf16.mxu0 0
        %754 = vmatpush1.bf16.xpose.msra.mxu0 %v737
        %755 = vmatprep.subr.bf16.mxu0 0
        %756 = vmatpush1.bf16.xpose.msra.mxu0 0
        %757 = vmatprep.subr.bf16.mxu0 0
        %758 = vmatpush1.bf16.xpose.msra.mxu0 0
        %759 = vmatprep.subr.bf16.mxu0 0
        %760 = vmatpush1.bf16.xpose.msra.mxu0 0
        %761 = vmatprep.subr.bf16.mxu0 0
        %762 = vmatpush1.bf16.xpose.msra.mxu0 0
        %763 = vmatprep.subr.bf16.mxu0 0
        %764 = vmatpush1.bf16.xpose.msra.mxu0 0
        %765 = vmatprep.subr.bf16.mxu0 0
        %766 = vmatpush1.bf16.xpose.msra.mxu0 0
        %767 = vmatprep.subr.bf16.mxu0 0
        %768 = vmatpush1.bf16.xpose.msra.mxu0 0
        %769 = vmatprep.subr.bf16.mxu0 0
        %770 = vmatpush1.bf16.xpose.msra.mxu0 0
        %771 = vmatprep.mubr.bf16.mxu0 0
        %772 = vmatmul.mubr.bf16.gmra.mrb[0].mxu0 %v692
        %v773 = vpop.f32.mrb[0].mxu0
        %v774 = vadd.f32 0.0, %v773
        %v775 = vpop.f32.mrb[0].mxu0
        %v776 = vpop.f32.mrb[0].mxu0
        %v777 = vadd.f32 0.0, %v776
        %v778 = vpop.f32.mrb[0].mxu0
        %779 = vmatprep.mubr.bf16.mxu0 0
        %780 = vmatmul.mubr.bf16.gmra.mrb[0].mxu0 %v695
        %v781 = vpop.f32.mrb[0].mxu0
        %v782 = vadd.f32 0.0, %v781
        %v783 = vpop.f32.mrb[0].mxu0
        %v784 = vpop.f32.mrb[0].mxu0
        %v785 = vadd.f32 0.0, %v784
        %v786 = vpop.f32.mrb[0].mxu0
        %787 = vmatprep.mubr.bf16.mxu0 0
        %788 = vmatmul.mubr.bf16.gmra.mrb[0].mxu0 %v698
        %v789 = vpop.f32.mrb[0].mxu0
        %v790 = vadd.f32 0.0, %v789
        %v791 = vpop.f32.mrb[0].mxu0
        %v792 = vpop.f32.mrb[0].mxu0
        %v793 = vadd.f32 0.0, %v792
        %v794 = vpop.f32.mrb[0].mxu0
        %795 = vmatprep.mubr.bf16.mxu0 0
        %796 = vmatmul.mubr.bf16.gmra.mrb[0].mxu0 %v701
        %v797 = vpop.f32.mrb[0].mxu0
        %v798 = vadd.f32 0.0, %v797
        %v799 = vpop.f32.mrb[0].mxu0
        %v800 = vpop.f32.mrb[0].mxu0
        %v801 = vadd.f32 0.0, %v800
        %v802 = vpop.f32.mrb[0].mxu0
        %803 = vmatprep.mubr.bf16.mxu0 0
        %804 = vmatmul.mubr.bf16.gmra.mrb[0].mxu0 %v704
        %v805 = vpop.f32.mrb[0].mxu0
        %v806 = vadd.f32 0.0, %v805
        %v807 = vpop.f32.mrb[0].mxu0
        %v808 = vpop.f32.mrb[0].mxu0
        %v809 = vadd.f32 0.0, %v808
        %v810 = vpop.f32.mrb[0].mxu0
        %811 = vmatprep.mubr.bf16.mxu0 0
        %812 = vmatmul.mubr.bf16.gmra.mrb[0].mxu0 %v707
        %v813 = vpop.f32.mrb[0].mxu0
        %v814 = vadd.f32 0.0, %v813
        %v815 = vpop.f32.mrb[0].mxu0
        %v816 = vpop.f32.mrb[0].mxu0
        %v817 = vadd.f32 0.0, %v816
        %v818 = vpop.f32.mrb[0].mxu0
        %819 = vmatprep.mubr.bf16.mxu0 0
        %820 = vmatmul.mubr.bf16.gmra.mrb[0].mxu0 %v710
        %v821 = vpop.f32.mrb[0].mxu0
        %v822 = vadd.f32 0.0, %v821
        %v823 = vpop.f32.mrb[0].mxu0
        %v824 = vpop.f32.mrb[0].mxu0
        %v825 = vadd.f32 0.0, %v824
        %v826 = vpop.f32.mrb[0].mxu0
        %827 = vmatprep.mubr.bf16.mxu0 0
        %828 = vmatmul.mubr.bf16.gmra.mrb[0].mxu0 %v713
        %v829 = vpop.f32.mrb[0].mxu0
        %v830 = vadd.f32 0.0, %v829
        %v831 = vpop.f32.mrb[0].mxu0
        %v832 = vpop.f32.mrb[0].mxu0
        %v833 = vadd.f32 0.0, %v832
        %v834 = vpop.f32.mrb[0].mxu0
        %835 = vdwg.mxu0
        %v836 = vsel %vm674, %v774, -1e+30
        %v837 = vsel %vm675, %v777, -1e+30
        %v838 = vsel %vm676, %v782, -1e+30
        %v839 = vsel %vm677, %v785, -1e+30
        %v840 = vsel %vm678, %v790, -1e+30
        %v841 = vsel %vm679, %v793, -1e+30
        %v842 = vsel %vm680, %v798, -1e+30
        %v843 = vsel %vm681, %v801, -1e+30
        %v844 = vsel %vm682, %v806, -1e+30
        %v845 = vsel %vm683, %v809, -1e+30
        %v846 = vsel %vm684, %v814, -1e+30
        %v847 = vsel %vm685, %v817, -1e+30
        %v848 = vsel %vm686, %v822, -1e+30
        %v849 = vsel %vm687, %v825, -1e+30
        %v850 = vsel %vm688, %v830, -1e+30
        %v851 = vsel %vm689, %v833, -1e+30
        %852 = vmax.xlane.f32.xlu0 %v836
        %v853 = vpop.xlane.xlu0 %852
        %854 = vmax.xlane.f32.xlu0 %v837
        %v855 = vpop.xlane.xlu0 %854
        %856 = vmax.xlane.f32.xlu0 %v838
        %v857 = vpop.xlane.xlu0 %856
        %858 = vmax.xlane.f32.xlu0 %v839
        %v859 = vpop.xlane.xlu0 %858
        %860 = vmax.xlane.f32.xlu0 %v840
        %v861 = vpop.xlane.xlu0 %860
        %862 = vmax.xlane.f32.xlu0 %v841
        %v863 = vpop.xlane.xlu0 %862
        %864 = vmax.xlane.f32.xlu0 %v842
        %v865 = vpop.xlane.xlu0 %864
        %866 = vmax.xlane.f32.xlu0 %v843
        %v867 = vpop.xlane.xlu0 %866
        %868 = vmax.xlane.f32.xlu0 %v844
        %v869 = vpop.xlane.xlu0 %868
        %870 = vmax.xlane.f32.xlu0 %v845
        %v871 = vpop.xlane.xlu0 %870
        %872 = vmax.xlane.f32.xlu0 %v846
        %v873 = vpop.xlane.xlu0 %872
        %874 = vmax.xlane.f32.xlu0 %v847
        %v875 = vpop.xlane.xlu0 %874
        %876 = vmax.xlane.f32.xlu0 %v848
        %v877 = vpop.xlane.xlu0 %876
        %878 = vmax.xlane.f32.xlu0 %v849
        %v879 = vpop.xlane.xlu0 %878
        %880 = vmax.xlane.f32.xlu0 %v850
        %v881 = vpop.xlane.xlu0 %880
        %882 = vmax.xlane.f32.xlu0 %v851
        %v883 = vpop.xlane.xlu0 %882
        %v884 = vsub.f32 %v836, %v853
        %v885 = vsub.f32 %v837, %v855
        %v886 = vsub.f32 %v838, %v857
        %v887 = vsub.f32 %v839, %v859
        %v888 = vsub.f32 %v840, %v861
        %v889 = vsub.f32 %v841, %v863
        %v890 = vsub.f32 %v842, %v865
        %v891 = vsub.f32 %v843, %v867
        %v892 = vsub.f32 %v844, %v869
        %v893 = vsub.f32 %v845, %v871
        %v894 = vsub.f32 %v846, %v873
        %v895 = vsub.f32 %v847, %v875
        %v896 = vsub.f32 %v848, %v877
        %v897 = vsub.f32 %v849, %v879
        %v898 = vsub.f32 %v850, %v881
        %v899 = vsub.f32 %v851, %v883
        %v900 = vmul.f32 %v884, 1.442695
        %v901 = vpow.pop %v900
        %v902 = vmul.f32 %v885, 1.442695
        %v903 = vpow.pop %v902
        %v904 = vmul.f32 %v886, 1.442695
        %v905 = vpow.pop %v904
        %v906 = vmul.f32 %v887, 1.442695
        %v907 = vpow.pop %v906
        %v908 = vmul.f32 %v888, 1.442695
        %v909 = vpow.pop %v908
        %v910 = vmul.f32 %v889, 1.442695
        %v911 = vpow.pop %v910
        %v912 = vmul.f32 %v890, 1.442695
        %v913 = vpow.pop %v912
        %v914 = vmul.f32 %v891, 1.442695
        %v915 = vpow.pop %v914
        %v916 = vmul.f32 %v892, 1.442695
        %v917 = vpow.pop %v916
        %v918 = vmul.f32 %v893, 1.442695
        %v919 = vpow.pop %v918
        %v920 = vmul.f32 %v894, 1.442695
        %v921 = vpow.pop %v920
        %v922 = vmul.f32 %v895, 1.442695
        %v923 = vpow.pop %v922
        %v924 = vmul.f32 %v896, 1.442695
        %v925 = vpow.pop %v924
        %v926 = vmul.f32 %v897, 1.442695
        %v927 = vpow.pop %v926
        %v928 = vmul.f32 %v898, 1.442695
        %v929 = vpow.pop %v928
        %v930 = vmul.f32 %v899, 1.442695
        %v931 = vpow.pop %v930
        %932 = vadd.xlane.f32.xlu0 %v901
        %v933 = vpop.xlane.xlu0 %932
        %934 = vadd.xlane.f32.xlu0 %v903
        %v935 = vpop.xlane.xlu0 %934
        %936 = vadd.xlane.f32.xlu0 %v905
        %v937 = vpop.xlane.xlu0 %936
        %938 = vadd.xlane.f32.xlu0 %v907
        %v939 = vpop.xlane.xlu0 %938
        %940 = vadd.xlane.f32.xlu0 %v909
        %v941 = vpop.xlane.xlu0 %940
        %942 = vadd.xlane.f32.xlu0 %v911
        %v943 = vpop.xlane.xlu0 %942
        %944 = vadd.xlane.f32.xlu0 %v913
        %v945 = vpop.xlane.xlu0 %944
        %946 = vadd.xlane.f32.xlu0 %v915
        %v947 = vpop.xlane.xlu0 %946
        %948 = vadd.xlane.f32.xlu0 %v917
        %v949 = vpop.xlane.xlu0 %948
        %950 = vadd.xlane.f32.xlu0 %v919
        %v951 = vpop.xlane.xlu0 %950
        %952 = vadd.xlane.f32.xlu0 %v921
        %v953 = vpop.xlane.xlu0 %952
        %954 = vadd.xlane.f32.xlu0 %v923
        %v955 = vpop.xlane.xlu0 %954
        %956 = vadd.xlane.f32.xlu0 %v925
        %v957 = vpop.xlane.xlu0 %956
        %958 = vadd.xlane.f32.xlu0 %v927
        %v959 = vpop.xlane.xlu0 %958
        %960 = vadd.xlane.f32.xlu0 %v929
        %v961 = vpop.xlane.xlu0 %960
        %962 = vadd.xlane.f32.xlu0 %v931
        %v963 = vpop.xlane.xlu0 %962
        %v964 = vrcp.pop %v933
        %v965 = vrcp.pop %v935
        %v966 = vrcp.pop %v937
        %v967 = vrcp.pop %v939
        %v968 = vrcp.pop %v941
        %v969 = vrcp.pop %v943
        %v970 = vrcp.pop %v945
        %v971 = vrcp.pop %v947
        %v972 = vrcp.pop %v949
        %v973 = vrcp.pop %v951
        %v974 = vrcp.pop %v953
        %v975 = vrcp.pop %v955
        %v976 = vrcp.pop %v957
        %v977 = vrcp.pop %v959
        %v978 = vrcp.pop %v961
        %v979 = vrcp.pop %v963
        %v980 = vmul.f32 %v901, %v964
        %v981 = vmul.f32 %v903, %v965
        %v982 = vmul.f32 %v905, %v966
        %v983 = vmul.f32 %v907, %v967
        %v984 = vmul.f32 %v909, %v968
        %v985 = vmul.f32 %v911, %v969
        %v986 = vmul.f32 %v913, %v970
        %v987 = vmul.f32 %v915, %v971
        %v988 = vmul.f32 %v917, %v972
        %v989 = vmul.f32 %v919, %v973
        %v990 = vmul.f32 %v921, %v974
        %v991 = vmul.f32 %v923, %v975
        %v992 = vmul.f32 %v925, %v976
        %v993 = vmul.f32 %v927, %v977
        %v994 = vmul.f32 %v929, %v978
        %v995 = vmul.f32 %v931, %v979
        %v996 = vpack.c.bf16 %v981, %v980
        %v997 = vpack.c.bf16 %v983, %v982
        %v998 = vpack.c.bf16 %v985, %v984
        %v999 = vpack.c.bf16 %v987, %v986
        %v1000 = vpack.c.bf16 %v989, %v988
        %v1001 = vpack.c.bf16 %v991, %v990
        %v1002 = vpack.c.bf16 %v993, %v992
        %v1003 = vpack.c.bf16 %v995, %v994
        %1004 = vmatprep.subr.bf16.mxu0 0
        %1005 = vmatpush1.bf16.msra.mxu0 %v647
        %1006 = vmatprep.subr.bf16.mxu0 0
        %1007 = vmatpush1.bf16.msra.mxu0 %v648
        %1008 = vmatprep.subr.bf16.mxu0 0
        %1009 = vmatpush1.bf16.msra.mxu0 %v649
        %1010 = vmatprep.subr.bf16.mxu0 0
        %1011 = vmatpush1.bf16.msra.mxu0 %v650
        %1012 = vmatprep.subr.bf16.mxu0 0
        %1013 = vmatpush1.bf16.msra.mxu0 %v651
        %1014 = vmatprep.subr.bf16.mxu0 0
        %1015 = vmatpush1.bf16.msra.mxu0 %v652
        %1016 = vmatprep.subr.bf16.mxu0 0
        %1017 = vmatpush1.bf16.msra.mxu0 %v653
        %1018 = vmatprep.subr.bf16.mxu0 0
        %1019 = vmatpush1.bf16.msra.mxu0 %v654
        %1020 = vmatprep.subr.bf16.mxu0 0
        %1021 = vmatpush1.bf16.msra.mxu0 0
        %1022 = vmatprep.subr.bf16.mxu0 0
        %1023 = vmatpush1.bf16.msra.mxu0 0
        %1024 = vmatprep.subr.bf16.mxu0 0
        %1025 = vmatpush1.bf16.msra.mxu0 0
        %1026 = vmatprep.subr.bf16.mxu0 0
        %1027 = vmatpush1.bf16.msra.mxu0 0
        %1028 = vmatprep.subr.bf16.mxu0 0
        %1029 = vmatpush1.bf16.msra.mxu0 0
        %1030 = vmatprep.subr.bf16.mxu0 0
        %1031 = vmatpush1.bf16.msra.mxu0 0
        %1032 = vmatprep.subr.bf16.mxu0 0
        %1033 = vmatpush1.bf16.msra.mxu0 0
        %1034 = vmatprep.subr.bf16.mxu0 0
        %1035 = vmatpush1.bf16.msra.mxu0 0
        %1036 = vmatprep.mubr.bf16.mxu0 0
        %1037 = vmatmul.mubr.bf16.gmra.mrb[0].mxu0 %v996
        %v1038 = vpop.f32.mrb[0].mxu0
        %v1039 = vadd.f32 0.0, %v1038
        %v1040 = vpop.f32.mrb[0].mxu0
        %v1041 = vpop.f32.mrb[0].mxu0
        %v1042 = vadd.f32 0.0, %v1041
        %v1043 = vpop.f32.mrb[0].mxu0
        %1044 = vmatprep.mubr.bf16.mxu0 0
        %1045 = vmatmul.mubr.bf16.gmra.mrb[0].mxu0 %v997
        %v1046 = vpop.f32.mrb[0].mxu0
        %v1047 = vadd.f32 0.0, %v1046
        %v1048 = vpop.f32.mrb[0].mxu0
        %v1049 = vpop.f32.mrb[0].mxu0
        %v1050 = vadd.f32 0.0, %v1049
        %v1051 = vpop.f32.mrb[0].mxu0
        %1052 = vmatprep.mubr.bf16.mxu0 0
        %1053 = vmatmul.mubr.bf16.gmra.mrb[0].mxu0 %v998
        %v1054 = vpop.f32.mrb[0].mxu0
        %v1055 = vadd.f32 0.0, %v1054
        %v1056 = vpop.f32.mrb[0].mxu0
        %v1057 = vpop.f32.mrb[0].mxu0
        %v1058 = vadd.f32 0.0, %v1057
        %v1059 = vpop.f32.mrb[0].mxu0
        %1060 = vmatprep.mubr.bf16.mxu0 0
        %1061 = vmatmul.mubr.bf16.gmra.mrb[0].mxu0 %v999
        %v1062 = vpop.f32.mrb[0].mxu0
        %v1063 = vadd.f32 0.0, %v1062
        %v1064 = vpop.f32.mrb[0].mxu0
        %v1065 = vpop.f32.mrb[0].mxu0
        %v1066 = vadd.f32 0.0, %v1065
        %v1067 = vpop.f32.mrb[0].mxu0
        %1068 = vmatprep.mubr.bf16.mxu0 0
        %1069 = vmatmul.mubr.bf16.gmra.mrb[0].mxu0 %v1000
        %v1070 = vpop.f32.mrb[0].mxu0
        %v1071 = vadd.f32 0.0, %v1070
        %v1072 = vpop.f32.mrb[0].mxu0
        %v1073 = vpop.f32.mrb[0].mxu0
        %v1074 = vadd.f32 0.0, %v1073
        %v1075 = vpop.f32.mrb[0].mxu0
        %1076 = vmatprep.mubr.bf16.mxu0 0
        %1077 = vmatmul.mubr.bf16.gmra.mrb[0].mxu0 %v1001
        %v1078 = vpop.f32.mrb[0].mxu0
        %v1079 = vadd.f32 0.0, %v1078
        %v1080 = vpop.f32.mrb[0].mxu0
        %v1081 = vpop.f32.mrb[0].mxu0
        %v1082 = vadd.f32 0.0, %v1081
        %v1083 = vpop.f32.mrb[0].mxu0
        %1084 = vmatprep.mubr.bf16.mxu0 0
        %1085 = vmatmul.mubr.bf16.gmra.mrb[0].mxu0 %v1002
        %v1086 = vpop.f32.mrb[0].mxu0
        %v1087 = vadd.f32 0.0, %v1086
        %v1088 = vpop.f32.mrb[0].mxu0
        %v1089 = vpop.f32.mrb[0].mxu0
        %v1090 = vadd.f32 0.0, %v1089
        %v1091 = vpop.f32.mrb[0].mxu0
        %1092 = vmatprep.mubr.bf16.mxu0 0
        %1093 = vmatmul.mubr.bf16.gmra.mrb[0].mxu0 %v1003
        %v1094 = vpop.f32.mrb[0].mxu0
        %v1095 = vadd.f32 0.0, %v1094
        %v1096 = vpop.f32.mrb[0].mxu0
        %v1097 = vpop.f32.mrb[0].mxu0
        %v1098 = vadd.f32 0.0, %v1097
        %v1099 = vpop.f32.mrb[0].mxu0
        %1100 = vdwg.mxu0
        %1109 = vrot.lane.b32.xlu0 %v631, 96
        %v1110 = vpop.permute.xlu0 %1109
        %1111 = vrot.lane.b32.xlu0 %v632, 96
        %v1112 = vpop.permute.xlu0 %1111
        %1113 = vrot.lane.b32.xlu0 %v633, 96
        %v1114 = vpop.permute.xlu0 %1113
        %1115 = vrot.lane.b32.xlu0 %v634, 96
        %v1116 = vpop.permute.xlu0 %1115
        %1117 = vrot.lane.b32.xlu0 %v635, 96
        %v1118 = vpop.permute.xlu0 %1117
        %1119 = vrot.lane.b32.xlu0 %v636, 96
        %v1120 = vpop.permute.xlu0 %1119
        %1121 = vrot.lane.b32.xlu0 %v637, 96
        %v1122 = vpop.permute.xlu0 %1121
        %1123 = vrot.lane.b32.xlu0 %v638, 96
        %v1124 = vpop.permute.xlu0 %1123
        %1133 = vrot.lane.b32.xlu0 %v639, 96
        %v1134 = vpop.permute.xlu0 %1133
        %1135 = vrot.lane.b32.xlu0 %v640, 96
        %v1136 = vpop.permute.xlu0 %1135
        %1137 = vrot.lane.b32.xlu0 %v641, 96
        %v1138 = vpop.permute.xlu0 %1137
        %1139 = vrot.lane.b32.xlu0 %v642, 96
        %v1140 = vpop.permute.xlu0 %1139
        %1141 = vrot.lane.b32.xlu0 %v643, 96
        %v1142 = vpop.permute.xlu0 %1141
        %1143 = vrot.lane.b32.xlu0 %v644, 96
        %v1144 = vpop.permute.xlu0 %1143
        %1145 = vrot.lane.b32.xlu0 %v645, 96
        %v1146 = vpop.permute.xlu0 %1145
        %1147 = vrot.lane.b32.xlu0 %v646, 96
        %v1148 = vpop.permute.xlu0 %1147
        %v1150 = vsel %vm690, %v1110, 0
        %v1153 = vsel %vm690, %v1112, 0
        %v1156 = vsel %vm690, %v1114, 0
        %v1159 = vsel %vm690, %v1116, 0
        %v1162 = vsel %vm690, %v1118, 0
        %v1165 = vsel %vm690, %v1120, 0
        %v1168 = vsel %vm690, %v1122, 0
        %v1171 = vsel %vm690, %v1124, 0
        %v1174 = vsel %vm690, %v1134, 0
        %v1177 = vsel %vm690, %v1136, 0
        %v1180 = vsel %vm690, %v1138, 0
        %v1183 = vsel %vm690, %v1140, 0
        %v1186 = vsel %vm690, %v1142, 0
        %v1189 = vsel %vm690, %v1144, 0
        %v1192 = vsel %vm690, %v1146, 0
        %v1195 = vsel %vm690, %v1148, 0
        %1197 = vmatprep.subr.bf16.mxu0 0
        %1198 = vmatpush1.bf16.xpose.msra.mxu0 %v1174
        %1199 = vmatprep.subr.bf16.mxu0 0
        %1200 = vmatpush1.bf16.xpose.msra.mxu0 %v1177
        %1201 = vmatprep.subr.bf16.mxu0 0
        %1202 = vmatpush1.bf16.xpose.msra.mxu0 %v1180
        %1203 = vmatprep.subr.bf16.mxu0 0
        %1204 = vmatpush1.bf16.xpose.msra.mxu0 %v1183
        %1205 = vmatprep.subr.bf16.mxu0 0
        %1206 = vmatpush1.bf16.xpose.msra.mxu0 %v1186
        %1207 = vmatprep.subr.bf16.mxu0 0
        %1208 = vmatpush1.bf16.xpose.msra.mxu0 %v1189
        %1209 = vmatprep.subr.bf16.mxu0 0
        %1210 = vmatpush1.bf16.xpose.msra.mxu0 %v1192
        %1211 = vmatprep.subr.bf16.mxu0 0
        %1212 = vmatpush1.bf16.xpose.msra.mxu0 %v1195
        %1213 = vmatprep.subr.bf16.mxu0 0
        %1214 = vmatpush1.bf16.xpose.msra.mxu0 0
        %1215 = vmatprep.subr.bf16.mxu0 0
        %1216 = vmatpush1.bf16.xpose.msra.mxu0 0
        %1217 = vmatprep.subr.bf16.mxu0 0
        %1218 = vmatpush1.bf16.xpose.msra.mxu0 0
        %1219 = vmatprep.subr.bf16.mxu0 0
        %1220 = vmatpush1.bf16.xpose.msra.mxu0 0
        %1221 = vmatprep.subr.bf16.mxu0 0
        %1222 = vmatpush1.bf16.xpose.msra.mxu0 0
        %1223 = vmatprep.subr.bf16.mxu0 0
        %1224 = vmatpush1.bf16.xpose.msra.mxu0 0
        %1225 = vmatprep.subr.bf16.mxu0 0
        %1226 = vmatpush1.bf16.xpose.msra.mxu0 0
        %1227 = vmatprep.subr.bf16.mxu0 0
        %1228 = vmatpush1.bf16.xpose.msra.mxu0 0
        %1229 = vmatprep.mubr.bf16.mxu0 0
        %1230 = vmatmul.mubr.bf16.gmra.mrb[0].mxu0 %v1150
        %v1231 = vpop.f32.mrb[0].mxu0
        %v1232 = vadd.f32 0.0, %v1231
        %v1233 = vpop.f32.mrb[0].mxu0
        %v1234 = vpop.f32.mrb[0].mxu0
        %v1235 = vadd.f32 0.0, %v1234
        %v1236 = vpop.f32.mrb[0].mxu0
        %1237 = vmatprep.mubr.bf16.mxu0 0
        %1238 = vmatmul.mubr.bf16.gmra.mrb[0].mxu0 %v1153
        %v1239 = vpop.f32.mrb[0].mxu0
        %v1240 = vadd.f32 0.0, %v1239
        %v1241 = vpop.f32.mrb[0].mxu0
        %v1242 = vpop.f32.mrb[0].mxu0
        %v1243 = vadd.f32 0.0, %v1242
        %v1244 = vpop.f32.mrb[0].mxu0
        %1245 = vmatprep.mubr.bf16.mxu0 0
        %1246 = vmatmul.mubr.bf16.gmra.mrb[0].mxu0 %v1156
        %v1247 = vpop.f32.mrb[0].mxu0
        %v1248 = vadd.f32 0.0, %v1247
        %v1249 = vpop.f32.mrb[0].mxu0
        %v1250 = vpop.f32.mrb[0].mxu0
        %v1251 = vadd.f32 0.0, %v1250
        %v1252 = vpop.f32.mrb[0].mxu0
        %1253 = vmatprep.mubr.bf16.mxu0 0
        %1254 = vmatmul.mubr.bf16.gmra.mrb[0].mxu0 %v1159
        %v1255 = vpop.f32.mrb[0].mxu0
        %v1256 = vadd.f32 0.0, %v1255
        %v1257 = vpop.f32.mrb[0].mxu0
        %v1258 = vpop.f32.mrb[0].mxu0
        %v1259 = vadd.f32 0.0, %v1258
        %v1260 = vpop.f32.mrb[0].mxu0
        %1261 = vmatprep.mubr.bf16.mxu0 0
        %1262 = vmatmul.mubr.bf16.gmra.mrb[0].mxu0 %v1162
        %v1263 = vpop.f32.mrb[0].mxu0
        %v1264 = vadd.f32 0.0, %v1263
        %v1265 = vpop.f32.mrb[0].mxu0
        %v1266 = vpop.f32.mrb[0].mxu0
        %v1267 = vadd.f32 0.0, %v1266
        %v1268 = vpop.f32.mrb[0].mxu0
        %1269 = vmatprep.mubr.bf16.mxu0 0
        %1270 = vmatmul.mubr.bf16.gmra.mrb[0].mxu0 %v1165
        %v1271 = vpop.f32.mrb[0].mxu0
        %v1272 = vadd.f32 0.0, %v1271
        %v1273 = vpop.f32.mrb[0].mxu0
        %v1274 = vpop.f32.mrb[0].mxu0
        %v1275 = vadd.f32 0.0, %v1274
        %v1276 = vpop.f32.mrb[0].mxu0
        %1277 = vmatprep.mubr.bf16.mxu0 0
        %1278 = vmatmul.mubr.bf16.gmra.mrb[0].mxu0 %v1168
        %v1279 = vpop.f32.mrb[0].mxu0
        %v1280 = vadd.f32 0.0, %v1279
        %v1281 = vpop.f32.mrb[0].mxu0
        %v1282 = vpop.f32.mrb[0].mxu0
        %v1283 = vadd.f32 0.0, %v1282
        %v1284 = vpop.f32.mrb[0].mxu0
        %1285 = vmatprep.mubr.bf16.mxu0 0
        %1286 = vmatmul.mubr.bf16.gmra.mrb[0].mxu0 %v1171
        %v1287 = vpop.f32.mrb[0].mxu0
        %v1288 = vadd.f32 0.0, %v1287
        %v1289 = vpop.f32.mrb[0].mxu0
        %v1290 = vpop.f32.mrb[0].mxu0
        %v1291 = vadd.f32 0.0, %v1290
        %v1292 = vpop.f32.mrb[0].mxu0
        %1293 = vdwg.mxu0
        %v1294 = vsel %vm674, %v1232, -1e+30
        %v1295 = vsel %vm675, %v1235, -1e+30
        %v1296 = vsel %vm676, %v1240, -1e+30
        %v1297 = vsel %vm677, %v1243, -1e+30
        %v1298 = vsel %vm678, %v1248, -1e+30
        %v1299 = vsel %vm679, %v1251, -1e+30
        %v1300 = vsel %vm680, %v1256, -1e+30
        %v1301 = vsel %vm681, %v1259, -1e+30
        %v1302 = vsel %vm682, %v1264, -1e+30
        %v1303 = vsel %vm683, %v1267, -1e+30
        %v1304 = vsel %vm684, %v1272, -1e+30
        %v1305 = vsel %vm685, %v1275, -1e+30
        %v1306 = vsel %vm686, %v1280, -1e+30
        %v1307 = vsel %vm687, %v1283, -1e+30
        %v1308 = vsel %vm688, %v1288, -1e+30
        %v1309 = vsel %vm689, %v1291, -1e+30
        %1310 = vmax.xlane.f32.xlu0 %v1294
        %v1311 = vpop.xlane.xlu0 %1310
        %1312 = vmax.xlane.f32.xlu0 %v1295
        %v1313 = vpop.xlane.xlu0 %1312
        %1314 = vmax.xlane.f32.xlu0 %v1296
        %v1315 = vpop.xlane.xlu0 %1314
        %1316 = vmax.xlane.f32.xlu0 %v1297
        %v1317 = vpop.xlane.xlu0 %1316
        %1318 = vmax.xlane.f32.xlu0 %v1298
        %v1319 = vpop.xlane.xlu0 %1318
        %1320 = vmax.xlane.f32.xlu0 %v1299
        %v1321 = vpop.xlane.xlu0 %1320
        %1322 = vmax.xlane.f32.xlu0 %v1300
        %v1323 = vpop.xlane.xlu0 %1322
        %1324 = vmax.xlane.f32.xlu0 %v1301
        %v1325 = vpop.xlane.xlu0 %1324
        %1326 = vmax.xlane.f32.xlu0 %v1302
        %v1327 = vpop.xlane.xlu0 %1326
        %1328 = vmax.xlane.f32.xlu0 %v1303
        %v1329 = vpop.xlane.xlu0 %1328
        %1330 = vmax.xlane.f32.xlu0 %v1304
        %v1331 = vpop.xlane.xlu0 %1330
        %1332 = vmax.xlane.f32.xlu0 %v1305
        %v1333 = vpop.xlane.xlu0 %1332
        %1334 = vmax.xlane.f32.xlu0 %v1306
        %v1335 = vpop.xlane.xlu0 %1334
        %1336 = vmax.xlane.f32.xlu0 %v1307
        %v1337 = vpop.xlane.xlu0 %1336
        %1338 = vmax.xlane.f32.xlu0 %v1308
        %v1339 = vpop.xlane.xlu0 %1338
        %1340 = vmax.xlane.f32.xlu0 %v1309
        %v1341 = vpop.xlane.xlu0 %1340
        %v1342 = vsub.f32 %v1294, %v1311
        %v1343 = vsub.f32 %v1295, %v1313
        %v1344 = vsub.f32 %v1296, %v1315
        %v1345 = vsub.f32 %v1297, %v1317
        %v1346 = vsub.f32 %v1298, %v1319
        %v1347 = vsub.f32 %v1299, %v1321
        %v1348 = vsub.f32 %v1300, %v1323
        %v1349 = vsub.f32 %v1301, %v1325
        %v1350 = vsub.f32 %v1302, %v1327
        %v1351 = vsub.f32 %v1303, %v1329
        %v1352 = vsub.f32 %v1304, %v1331
        %v1353 = vsub.f32 %v1305, %v1333
        %v1354 = vsub.f32 %v1306, %v1335
        %v1355 = vsub.f32 %v1307, %v1337
        %v1356 = vsub.f32 %v1308, %v1339
        %v1357 = vsub.f32 %v1309, %v1341
        %v1358 = vmul.f32 %v1342, 1.442695
        %v1359 = vpow.pop %v1358
        %v1360 = vmul.f32 %v1343, 1.442695
        %v1361 = vpow.pop %v1360
        %v1362 = vmul.f32 %v1344, 1.442695
        %v1363 = vpow.pop %v1362
        %v1364 = vmul.f32 %v1345, 1.442695
        %v1365 = vpow.pop %v1364
        %v1366 = vmul.f32 %v1346, 1.442695
        %v1367 = vpow.pop %v1366
        %v1368 = vmul.f32 %v1347, 1.442695
        %v1369 = vpow.pop %v1368
        %v1370 = vmul.f32 %v1348, 1.442695
        %v1371 = vpow.pop %v1370
        %v1372 = vmul.f32 %v1349, 1.442695
        %v1373 = vpow.pop %v1372
        %v1374 = vmul.f32 %v1350, 1.442695
        %v1375 = vpow.pop %v1374
        %v1376 = vmul.f32 %v1351, 1.442695
        %v1377 = vpow.pop %v1376
        %v1378 = vmul.f32 %v1352, 1.442695
        %v1379 = vpow.pop %v1378
        %v1380 = vmul.f32 %v1353, 1.442695
        %v1381 = vpow.pop %v1380
        %v1382 = vmul.f32 %v1354, 1.442695
        %v1383 = vpow.pop %v1382
        %v1384 = vmul.f32 %v1355, 1.442695
        %v1385 = vpow.pop %v1384
        %v1386 = vmul.f32 %v1356, 1.442695
        %v1387 = vpow.pop %v1386
        %v1388 = vmul.f32 %v1357, 1.442695
        %v1389 = vpow.pop %v1388
        %1390 = vadd.xlane.f32.xlu0 %v1359
        %v1391 = vpop.xlane.xlu0 %1390
        %1392 = vadd.xlane.f32.xlu0 %v1361
        %v1393 = vpop.xlane.xlu0 %1392
        %1394 = vadd.xlane.f32.xlu0 %v1363
        %v1395 = vpop.xlane.xlu0 %1394
        %1396 = vadd.xlane.f32.xlu0 %v1365
        %v1397 = vpop.xlane.xlu0 %1396
        %1398 = vadd.xlane.f32.xlu0 %v1367
        %v1399 = vpop.xlane.xlu0 %1398
        %1400 = vadd.xlane.f32.xlu0 %v1369
        %v1401 = vpop.xlane.xlu0 %1400
        %1402 = vadd.xlane.f32.xlu0 %v1371
        %v1403 = vpop.xlane.xlu0 %1402
        %1404 = vadd.xlane.f32.xlu0 %v1373
        %v1405 = vpop.xlane.xlu0 %1404
        %1406 = vadd.xlane.f32.xlu0 %v1375
        %v1407 = vpop.xlane.xlu0 %1406
        %1408 = vadd.xlane.f32.xlu0 %v1377
        %v1409 = vpop.xlane.xlu0 %1408
        %1410 = vadd.xlane.f32.xlu0 %v1379
        %v1411 = vpop.xlane.xlu0 %1410
        %1412 = vadd.xlane.f32.xlu0 %v1381
        %v1413 = vpop.xlane.xlu0 %1412
        %1414 = vadd.xlane.f32.xlu0 %v1383
        %v1415 = vpop.xlane.xlu0 %1414
        %1416 = vadd.xlane.f32.xlu0 %v1385
        %v1417 = vpop.xlane.xlu0 %1416
        %1418 = vadd.xlane.f32.xlu0 %v1387
        %v1419 = vpop.xlane.xlu0 %1418
        %1420 = vadd.xlane.f32.xlu0 %v1389
        %v1421 = vpop.xlane.xlu0 %1420
        %v1422 = vrcp.pop %v1391
        %v1423 = vrcp.pop %v1393
        %v1424 = vrcp.pop %v1395
        %v1425 = vrcp.pop %v1397
        %v1426 = vrcp.pop %v1399
        %v1427 = vrcp.pop %v1401
        %v1428 = vrcp.pop %v1403
        %v1429 = vrcp.pop %v1405
        %v1430 = vrcp.pop %v1407
        %v1431 = vrcp.pop %v1409
        %v1432 = vrcp.pop %v1411
        %v1433 = vrcp.pop %v1413
        %v1434 = vrcp.pop %v1415
        %v1435 = vrcp.pop %v1417
        %v1436 = vrcp.pop %v1419
        %v1437 = vrcp.pop %v1421
        %v1438 = vmul.f32 %v1359, %v1422
        %v1439 = vmul.f32 %v1361, %v1423
        %v1440 = vmul.f32 %v1363, %v1424
        %v1441 = vmul.f32 %v1365, %v1425
        %v1442 = vmul.f32 %v1367, %v1426
        %v1443 = vmul.f32 %v1369, %v1427
        %v1444 = vmul.f32 %v1371, %v1428
        %v1445 = vmul.f32 %v1373, %v1429
        %v1446 = vmul.f32 %v1375, %v1430
        %v1447 = vmul.f32 %v1377, %v1431
        %v1448 = vmul.f32 %v1379, %v1432
        %v1449 = vmul.f32 %v1381, %v1433
        %v1450 = vmul.f32 %v1383, %v1434
        %v1451 = vmul.f32 %v1385, %v1435
        %v1452 = vmul.f32 %v1387, %v1436
        %v1453 = vmul.f32 %v1389, %v1437
        %v1454 = vpack.c.bf16 %v1439, %v1438
        %v1455 = vpack.c.bf16 %v1441, %v1440
        %v1456 = vpack.c.bf16 %v1443, %v1442
        %v1457 = vpack.c.bf16 %v1445, %v1444
        %v1458 = vpack.c.bf16 %v1447, %v1446
        %v1459 = vpack.c.bf16 %v1449, %v1448
        %v1460 = vpack.c.bf16 %v1451, %v1450
        %v1461 = vpack.c.bf16 %v1453, %v1452
        %1470 = vrot.lane.b32.xlu0 %v647, 96
        %v1471 = vpop.permute.xlu0 %1470
        %1472 = vrot.lane.b32.xlu0 %v648, 96
        %v1473 = vpop.permute.xlu0 %1472
        %1474 = vrot.lane.b32.xlu0 %v649, 96
        %v1475 = vpop.permute.xlu0 %1474
        %1476 = vrot.lane.b32.xlu0 %v650, 96
        %v1477 = vpop.permute.xlu0 %1476
        %1478 = vrot.lane.b32.xlu0 %v651, 96
        %v1479 = vpop.permute.xlu0 %1478
        %1480 = vrot.lane.b32.xlu0 %v652, 96
        %v1481 = vpop.permute.xlu0 %1480
        %1482 = vrot.lane.b32.xlu0 %v653, 96
        %v1483 = vpop.permute.xlu0 %1482
        %1484 = vrot.lane.b32.xlu0 %v654, 96
        %v1485 = vpop.permute.xlu0 %1484
        %1494 = vmatprep.subr.bf16.mxu0 0
        %1495 = vmatpush1.bf16.msra.mxu0 %v1471
        %1496 = vmatprep.subr.bf16.mxu0 0
        %1497 = vmatpush1.bf16.msra.mxu0 %v1473
        %1498 = vmatprep.subr.bf16.mxu0 0
        %1499 = vmatpush1.bf16.msra.mxu0 %v1475
        %1500 = vmatprep.subr.bf16.mxu0 0
        %1501 = vmatpush1.bf16.msra.mxu0 %v1477
        %1502 = vmatprep.subr.bf16.mxu0 0
        %1503 = vmatpush1.bf16.msra.mxu0 %v1479
        %1504 = vmatprep.subr.bf16.mxu0 0
        %1505 = vmatpush1.bf16.msra.mxu0 %v1481
        %1506 = vmatprep.subr.bf16.mxu0 0
        %1507 = vmatpush1.bf16.msra.mxu0 %v1483
        %1508 = vmatprep.subr.bf16.mxu0 0
        %1509 = vmatpush1.bf16.msra.mxu0 %v1485
        %1510 = vmatprep.subr.bf16.mxu0 0
        %1511 = vmatpush1.bf16.msra.mxu0 0
        %1512 = vmatprep.subr.bf16.mxu0 0
        %1513 = vmatpush1.bf16.msra.mxu0 0
        %1514 = vmatprep.subr.bf16.mxu0 0
        %1515 = vmatpush1.bf16.msra.mxu0 0
        %1516 = vmatprep.subr.bf16.mxu0 0
        %1517 = vmatpush1.bf16.msra.mxu0 0
        %1518 = vmatprep.subr.bf16.mxu0 0
        %1519 = vmatpush1.bf16.msra.mxu0 0
        %1520 = vmatprep.subr.bf16.mxu0 0
        %1521 = vmatpush1.bf16.msra.mxu0 0
        %1522 = vmatprep.subr.bf16.mxu0 0
        %1523 = vmatpush1.bf16.msra.mxu0 0
        %1524 = vmatprep.subr.bf16.mxu0 0
        %1525 = vmatpush1.bf16.msra.mxu0 0
        %1526 = vmatprep.mubr.bf16.mxu0 0
        %1527 = vmatmul.mubr.bf16.gmra.mrb[0].mxu0 %v1454
        %v1528 = vpop.f32.mrb[0].mxu0
        %v1529 = vadd.f32 0.0, %v1528
        %v1530 = vpop.f32.mrb[0].mxu0
        %v1531 = vpop.f32.mrb[0].mxu0
        %v1532 = vadd.f32 0.0, %v1531
        %v1533 = vpop.f32.mrb[0].mxu0
        %1534 = vmatprep.mubr.bf16.mxu0 0
        %1535 = vmatmul.mubr.bf16.gmra.mrb[0].mxu0 %v1455
        %v1536 = vpop.f32.mrb[0].mxu0
        %v1537 = vadd.f32 0.0, %v1536
        %v1538 = vpop.f32.mrb[0].mxu0
        %v1539 = vpop.f32.mrb[0].mxu0
        %v1540 = vadd.f32 0.0, %v1539
        %v1541 = vpop.f32.mrb[0].mxu0
        %1542 = vmatprep.mubr.bf16.mxu0 0
        %1543 = vmatmul.mubr.bf16.gmra.mrb[0].mxu0 %v1456
        %v1544 = vpop.f32.mrb[0].mxu0
        %v1545 = vadd.f32 0.0, %v1544
        %v1546 = vpop.f32.mrb[0].mxu0
        %v1547 = vpop.f32.mrb[0].mxu0
        %v1548 = vadd.f32 0.0, %v1547
        %v1549 = vpop.f32.mrb[0].mxu0
        %1550 = vmatprep.mubr.bf16.mxu0 0
        %1551 = vmatmul.mubr.bf16.gmra.mrb[0].mxu0 %v1457
        %v1552 = vpop.f32.mrb[0].mxu0
        %v1553 = vadd.f32 0.0, %v1552
        %v1554 = vpop.f32.mrb[0].mxu0
        %v1555 = vpop.f32.mrb[0].mxu0
        %v1556 = vadd.f32 0.0, %v1555
        %v1557 = vpop.f32.mrb[0].mxu0
        %1558 = vmatprep.mubr.bf16.mxu0 0
        %1559 = vmatmul.mubr.bf16.gmra.mrb[0].mxu0 %v1458
        %v1560 = vpop.f32.mrb[0].mxu0
        %v1561 = vadd.f32 0.0, %v1560
        %v1562 = vpop.f32.mrb[0].mxu0
        %v1563 = vpop.f32.mrb[0].mxu0
        %v1564 = vadd.f32 0.0, %v1563
        %v1565 = vpop.f32.mrb[0].mxu0
        %1566 = vmatprep.mubr.bf16.mxu0 0
        %1567 = vmatmul.mubr.bf16.gmra.mrb[0].mxu0 %v1459
        %v1568 = vpop.f32.mrb[0].mxu0
        %v1569 = vadd.f32 0.0, %v1568
        %v1570 = vpop.f32.mrb[0].mxu0
        %v1571 = vpop.f32.mrb[0].mxu0
        %v1572 = vadd.f32 0.0, %v1571
        %v1573 = vpop.f32.mrb[0].mxu0
        %1574 = vmatprep.mubr.bf16.mxu0 0
        %1575 = vmatmul.mubr.bf16.gmra.mrb[0].mxu0 %v1460
        %v1576 = vpop.f32.mrb[0].mxu0
        %v1577 = vadd.f32 0.0, %v1576
        %v1578 = vpop.f32.mrb[0].mxu0
        %v1579 = vpop.f32.mrb[0].mxu0
        %v1580 = vadd.f32 0.0, %v1579
        %v1581 = vpop.f32.mrb[0].mxu0
        %1582 = vmatprep.mubr.bf16.mxu0 0
        %1583 = vmatmul.mubr.bf16.gmra.mrb[0].mxu0 %v1461
        %v1584 = vpop.f32.mrb[0].mxu0
        %v1585 = vadd.f32 0.0, %v1584
        %v1586 = vpop.f32.mrb[0].mxu0
        %v1587 = vpop.f32.mrb[0].mxu0
        %v1588 = vadd.f32 0.0, %v1587
        %v1589 = vpop.f32.mrb[0].mxu0
        %1590 = vdwg.mxu0
        %1591 = vrot.lane.b32.xlu0 %v631, 64
        %v1592 = vpop.permute.xlu0 %1591
        %1593 = vrot.lane.b32.xlu0 %v632, 64
        %v1594 = vpop.permute.xlu0 %1593
        %1595 = vrot.lane.b32.xlu0 %v633, 64
        %v1596 = vpop.permute.xlu0 %1595
        %1597 = vrot.lane.b32.xlu0 %v634, 64
        %v1598 = vpop.permute.xlu0 %1597
        %1599 = vrot.lane.b32.xlu0 %v635, 64
        %v1600 = vpop.permute.xlu0 %1599
        %1601 = vrot.lane.b32.xlu0 %v636, 64
        %v1602 = vpop.permute.xlu0 %1601
        %1603 = vrot.lane.b32.xlu0 %v637, 64
        %v1604 = vpop.permute.xlu0 %1603
        %1605 = vrot.lane.b32.xlu0 %v638, 64
        %v1606 = vpop.permute.xlu0 %1605
        %1607 = vrot.lane.b32.xlu0 %v639, 64
        %v1608 = vpop.permute.xlu0 %1607
        %1609 = vrot.lane.b32.xlu0 %v640, 64
        %v1610 = vpop.permute.xlu0 %1609
        %1611 = vrot.lane.b32.xlu0 %v641, 64
        %v1612 = vpop.permute.xlu0 %1611
        %1613 = vrot.lane.b32.xlu0 %v642, 64
        %v1614 = vpop.permute.xlu0 %1613
        %1615 = vrot.lane.b32.xlu0 %v643, 64
        %v1616 = vpop.permute.xlu0 %1615
        %1617 = vrot.lane.b32.xlu0 %v644, 64
        %v1618 = vpop.permute.xlu0 %1617
        %1619 = vrot.lane.b32.xlu0 %v645, 64
        %v1620 = vpop.permute.xlu0 %1619
        %1621 = vrot.lane.b32.xlu0 %v646, 64
        %v1622 = vpop.permute.xlu0 %1621
        %v1624 = vsel %vm690, %v1592, 0
        %v1627 = vsel %vm690, %v1594, 0
        %v1630 = vsel %vm690, %v1596, 0
        %v1633 = vsel %vm690, %v1598, 0
        %v1636 = vsel %vm690, %v1600, 0
        %v1639 = vsel %vm690, %v1602, 0
        %v1642 = vsel %vm690, %v1604, 0
        %v1645 = vsel %vm690, %v1606, 0
        %v1648 = vsel %vm690, %v1608, 0
        %v1651 = vsel %vm690, %v1610, 0
        %v1654 = vsel %vm690, %v1612, 0
        %v1657 = vsel %vm690, %v1614, 0
        %v1660 = vsel %vm690, %v1616, 0
        %v1663 = vsel %vm690, %v1618, 0
        %v1666 = vsel %vm690, %v1620, 0
        %v1669 = vsel %vm690, %v1622, 0
        %1671 = vmatprep.subr.bf16.mxu0 0
        %1672 = vmatpush1.bf16.xpose.msra.mxu0 %v1648
        %1673 = vmatprep.subr.bf16.mxu0 0
        %1674 = vmatpush1.bf16.xpose.msra.mxu0 %v1651
        %1675 = vmatprep.subr.bf16.mxu0 0
        %1676 = vmatpush1.bf16.xpose.msra.mxu0 %v1654
        %1677 = vmatprep.subr.bf16.mxu0 0
        %1678 = vmatpush1.bf16.xpose.msra.mxu0 %v1657
        %1679 = vmatprep.subr.bf16.mxu0 0
        %1680 = vmatpush1.bf16.xpose.msra.mxu0 %v1660
        %1681 = vmatprep.subr.bf16.mxu0 0
        %1682 = vmatpush1.bf16.xpose.msra.mxu0 %v1663
        %1683 = vmatprep.subr.bf16.mxu0 0
        %1684 = vmatpush1.bf16.xpose.msra.mxu0 %v1666
        %1685 = vmatprep.subr.bf16.mxu0 0
        %1686 = vmatpush1.bf16.xpose.msra.mxu0 %v1669
        %1687 = vmatprep.subr.bf16.mxu0 0
        %1688 = vmatpush1.bf16.xpose.msra.mxu0 0
        %1689 = vmatprep.subr.bf16.mxu0 0
        %1690 = vmatpush1.bf16.xpose.msra.mxu0 0
        %1691 = vmatprep.subr.bf16.mxu0 0
        %1692 = vmatpush1.bf16.xpose.msra.mxu0 0
        %1693 = vmatprep.subr.bf16.mxu0 0
        %1694 = vmatpush1.bf16.xpose.msra.mxu0 0
        %1695 = vmatprep.subr.bf16.mxu0 0
        %1696 = vmatpush1.bf16.xpose.msra.mxu0 0
        %1697 = vmatprep.subr.bf16.mxu0 0
        %1698 = vmatpush1.bf16.xpose.msra.mxu0 0
        %1699 = vmatprep.subr.bf16.mxu0 0
        %1700 = vmatpush1.bf16.xpose.msra.mxu0 0
        %1701 = vmatprep.subr.bf16.mxu0 0
        %1702 = vmatpush1.bf16.xpose.msra.mxu0 0
        %1703 = vmatprep.mubr.bf16.mxu0 0
        %1704 = vmatmul.mubr.bf16.gmra.mrb[0].mxu0 %v1624
        %v1705 = vpop.f32.mrb[0].mxu0
        %v1706 = vadd.f32 0.0, %v1705
        %v1707 = vpop.f32.mrb[0].mxu0
        %v1708 = vpop.f32.mrb[0].mxu0
        %v1709 = vadd.f32 0.0, %v1708
        %v1710 = vpop.f32.mrb[0].mxu0
        %1711 = vmatprep.mubr.bf16.mxu0 0
        %1712 = vmatmul.mubr.bf16.gmra.mrb[0].mxu0 %v1627
        %v1713 = vpop.f32.mrb[0].mxu0
        %v1714 = vadd.f32 0.0, %v1713
        %v1715 = vpop.f32.mrb[0].mxu0
        %v1716 = vpop.f32.mrb[0].mxu0
        %v1717 = vadd.f32 0.0, %v1716
        %v1718 = vpop.f32.mrb[0].mxu0
        %1719 = vmatprep.mubr.bf16.mxu0 0
        %1720 = vmatmul.mubr.bf16.gmra.mrb[0].mxu0 %v1630
        %v1721 = vpop.f32.mrb[0].mxu0
        %v1722 = vadd.f32 0.0, %v1721
        %v1723 = vpop.f32.mrb[0].mxu0
        %v1724 = vpop.f32.mrb[0].mxu0
        %v1725 = vadd.f32 0.0, %v1724
        %v1726 = vpop.f32.mrb[0].mxu0
        %1727 = vmatprep.mubr.bf16.mxu0 0
        %1728 = vmatmul.mubr.bf16.gmra.mrb[0].mxu0 %v1633
        %v1729 = vpop.f32.mrb[0].mxu0
        %v1730 = vadd.f32 0.0, %v1729
        %v1731 = vpop.f32.mrb[0].mxu0
        %v1732 = vpop.f32.mrb[0].mxu0
        %v1733 = vadd.f32 0.0, %v1732
        %v1734 = vpop.f32.mrb[0].mxu0
        %1735 = vmatprep.mubr.bf16.mxu0 0
        %1736 = vmatmul.mubr.bf16.gmra.mrb[0].mxu0 %v1636
        %v1737 = vpop.f32.mrb[0].mxu0
        %v1738 = vadd.f32 0.0, %v1737
        %v1739 = vpop.f32.mrb[0].mxu0
        %v1740 = vpop.f32.mrb[0].mxu0
        %v1741 = vadd.f32 0.0, %v1740
        %v1742 = vpop.f32.mrb[0].mxu0
        %1743 = vmatprep.mubr.bf16.mxu0 0
        %1744 = vmatmul.mubr.bf16.gmra.mrb[0].mxu0 %v1639
        %v1745 = vpop.f32.mrb[0].mxu0
        %v1746 = vadd.f32 0.0, %v1745
        %v1747 = vpop.f32.mrb[0].mxu0
        %v1748 = vpop.f32.mrb[0].mxu0
        %v1749 = vadd.f32 0.0, %v1748
        %v1750 = vpop.f32.mrb[0].mxu0
        %1751 = vmatprep.mubr.bf16.mxu0 0
        %1752 = vmatmul.mubr.bf16.gmra.mrb[0].mxu0 %v1642
        %v1753 = vpop.f32.mrb[0].mxu0
        %v1754 = vadd.f32 0.0, %v1753
        %v1755 = vpop.f32.mrb[0].mxu0
        %v1756 = vpop.f32.mrb[0].mxu0
        %v1757 = vadd.f32 0.0, %v1756
        %v1758 = vpop.f32.mrb[0].mxu0
        %1759 = vmatprep.mubr.bf16.mxu0 0
        %1760 = vmatmul.mubr.bf16.gmra.mrb[0].mxu0 %v1645
        %v1761 = vpop.f32.mrb[0].mxu0
        %v1762 = vadd.f32 0.0, %v1761
        %v1763 = vpop.f32.mrb[0].mxu0
        %v1764 = vpop.f32.mrb[0].mxu0
        %v1765 = vadd.f32 0.0, %v1764
        %v1766 = vpop.f32.mrb[0].mxu0
        %1767 = vdwg.mxu0
        %v1768 = vsel %vm674, %v1706, -1e+30
        %v1769 = vsel %vm675, %v1709, -1e+30
        %v1770 = vsel %vm676, %v1714, -1e+30
        %v1771 = vsel %vm677, %v1717, -1e+30
        %v1772 = vsel %vm678, %v1722, -1e+30
        %v1773 = vsel %vm679, %v1725, -1e+30
        %v1774 = vsel %vm680, %v1730, -1e+30
        %v1775 = vsel %vm681, %v1733, -1e+30
        %v1776 = vsel %vm682, %v1738, -1e+30
        %v1777 = vsel %vm683, %v1741, -1e+30
        %v1778 = vsel %vm684, %v1746, -1e+30
        %v1779 = vsel %vm685, %v1749, -1e+30
        %v1780 = vsel %vm686, %v1754, -1e+30
        %v1781 = vsel %vm687, %v1757, -1e+30
        %v1782 = vsel %vm688, %v1762, -1e+30
        %v1783 = vsel %vm689, %v1765, -1e+30
        %1784 = vmax.xlane.f32.xlu0 %v1768
        %v1785 = vpop.xlane.xlu0 %1784
        %1786 = vmax.xlane.f32.xlu0 %v1769
        %v1787 = vpop.xlane.xlu0 %1786
        %1788 = vmax.xlane.f32.xlu0 %v1770
        %v1789 = vpop.xlane.xlu0 %1788
        %1790 = vmax.xlane.f32.xlu0 %v1771
        %v1791 = vpop.xlane.xlu0 %1790
        %1792 = vmax.xlane.f32.xlu0 %v1772
        %v1793 = vpop.xlane.xlu0 %1792
        %1794 = vmax.xlane.f32.xlu0 %v1773
        %v1795 = vpop.xlane.xlu0 %1794
        %1796 = vmax.xlane.f32.xlu0 %v1774
        %v1797 = vpop.xlane.xlu0 %1796
        %1798 = vmax.xlane.f32.xlu0 %v1775
        %v1799 = vpop.xlane.xlu0 %1798
        %1800 = vmax.xlane.f32.xlu0 %v1776
        %v1801 = vpop.xlane.xlu0 %1800
        %1802 = vmax.xlane.f32.xlu0 %v1777
        %v1803 = vpop.xlane.xlu0 %1802
        %1804 = vmax.xlane.f32.xlu0 %v1778
        %v1805 = vpop.xlane.xlu0 %1804
        %1806 = vmax.xlane.f32.xlu0 %v1779
        %v1807 = vpop.xlane.xlu0 %1806
        %1808 = vmax.xlane.f32.xlu0 %v1780
        %v1809 = vpop.xlane.xlu0 %1808
        %1810 = vmax.xlane.f32.xlu0 %v1781
        %v1811 = vpop.xlane.xlu0 %1810
        %1812 = vmax.xlane.f32.xlu0 %v1782
        %v1813 = vpop.xlane.xlu0 %1812
        %1814 = vmax.xlane.f32.xlu0 %v1783
        %v1815 = vpop.xlane.xlu0 %1814
        %v1816 = vsub.f32 %v1768, %v1785
        %v1817 = vsub.f32 %v1769, %v1787
        %v1818 = vsub.f32 %v1770, %v1789
        %v1819 = vsub.f32 %v1771, %v1791
        %v1820 = vsub.f32 %v1772, %v1793
        %v1821 = vsub.f32 %v1773, %v1795
        %v1822 = vsub.f32 %v1774, %v1797
        %v1823 = vsub.f32 %v1775, %v1799
        %v1824 = vsub.f32 %v1776, %v1801
        %v1825 = vsub.f32 %v1777, %v1803
        %v1826 = vsub.f32 %v1778, %v1805
        %v1827 = vsub.f32 %v1779, %v1807
        %v1828 = vsub.f32 %v1780, %v1809
        %v1829 = vsub.f32 %v1781, %v1811
        %v1830 = vsub.f32 %v1782, %v1813
        %v1831 = vsub.f32 %v1783, %v1815
        %v1832 = vmul.f32 %v1816, 1.442695
        %v1833 = vpow.pop %v1832
        %v1834 = vmul.f32 %v1817, 1.442695
        %v1835 = vpow.pop %v1834
        %v1836 = vmul.f32 %v1818, 1.442695
        %v1837 = vpow.pop %v1836
        %v1838 = vmul.f32 %v1819, 1.442695
        %v1839 = vpow.pop %v1838
        %v1840 = vmul.f32 %v1820, 1.442695
        %v1841 = vpow.pop %v1840
        %v1842 = vmul.f32 %v1821, 1.442695
        %v1843 = vpow.pop %v1842
        %v1844 = vmul.f32 %v1822, 1.442695
        %v1845 = vpow.pop %v1844
        %v1846 = vmul.f32 %v1823, 1.442695
        %v1847 = vpow.pop %v1846
        %v1848 = vmul.f32 %v1824, 1.442695
        %v1849 = vpow.pop %v1848
        %v1850 = vmul.f32 %v1825, 1.442695
        %v1851 = vpow.pop %v1850
        %v1852 = vmul.f32 %v1826, 1.442695
        %v1853 = vpow.pop %v1852
        %v1854 = vmul.f32 %v1827, 1.442695
        %v1855 = vpow.pop %v1854
        %v1856 = vmul.f32 %v1828, 1.442695
        %v1857 = vpow.pop %v1856
        %v1858 = vmul.f32 %v1829, 1.442695
        %v1859 = vpow.pop %v1858
        %v1860 = vmul.f32 %v1830, 1.442695
        %v1861 = vpow.pop %v1860
        %v1862 = vmul.f32 %v1831, 1.442695
        %v1863 = vpow.pop %v1862
        %1864 = vadd.xlane.f32.xlu0 %v1833
        %v1865 = vpop.xlane.xlu0 %1864
        %1866 = vadd.xlane.f32.xlu0 %v1835
        %v1867 = vpop.xlane.xlu0 %1866
        %1868 = vadd.xlane.f32.xlu0 %v1837
        %v1869 = vpop.xlane.xlu0 %1868
        %1870 = vadd.xlane.f32.xlu0 %v1839
        %v1871 = vpop.xlane.xlu0 %1870
        %1872 = vadd.xlane.f32.xlu0 %v1841
        %v1873 = vpop.xlane.xlu0 %1872
        %1874 = vadd.xlane.f32.xlu0 %v1843
        %v1875 = vpop.xlane.xlu0 %1874
        %1876 = vadd.xlane.f32.xlu0 %v1845
        %v1877 = vpop.xlane.xlu0 %1876
        %1878 = vadd.xlane.f32.xlu0 %v1847
        %v1879 = vpop.xlane.xlu0 %1878
        %1880 = vadd.xlane.f32.xlu0 %v1849
        %v1881 = vpop.xlane.xlu0 %1880
        %1882 = vadd.xlane.f32.xlu0 %v1851
        %v1883 = vpop.xlane.xlu0 %1882
        %1884 = vadd.xlane.f32.xlu0 %v1853
        %v1885 = vpop.xlane.xlu0 %1884
        %1886 = vadd.xlane.f32.xlu0 %v1855
        %v1887 = vpop.xlane.xlu0 %1886
        %1888 = vadd.xlane.f32.xlu0 %v1857
        %v1889 = vpop.xlane.xlu0 %1888
        %1890 = vadd.xlane.f32.xlu0 %v1859
        %v1891 = vpop.xlane.xlu0 %1890
        %1892 = vadd.xlane.f32.xlu0 %v1861
        %v1893 = vpop.xlane.xlu0 %1892
        %1894 = vadd.xlane.f32.xlu0 %v1863
        %v1895 = vpop.xlane.xlu0 %1894
        %v1896 = vrcp.pop %v1865
        %v1897 = vrcp.pop %v1867
        %v1898 = vrcp.pop %v1869
        %v1899 = vrcp.pop %v1871
        %v1900 = vrcp.pop %v1873
        %v1901 = vrcp.pop %v1875
        %v1902 = vrcp.pop %v1877
        %v1903 = vrcp.pop %v1879
        %v1904 = vrcp.pop %v1881
        %v1905 = vrcp.pop %v1883
        %v1906 = vrcp.pop %v1885
        %v1907 = vrcp.pop %v1887
        %v1908 = vrcp.pop %v1889
        %v1909 = vrcp.pop %v1891
        %v1910 = vrcp.pop %v1893
        %v1911 = vrcp.pop %v1895
        %v1912 = vmul.f32 %v1833, %v1896
        %v1913 = vmul.f32 %v1835, %v1897
        %v1914 = vmul.f32 %v1837, %v1898
        %v1915 = vmul.f32 %v1839, %v1899
        %v1916 = vmul.f32 %v1841, %v1900
        %v1917 = vmul.f32 %v1843, %v1901
        %v1918 = vmul.f32 %v1845, %v1902
        %v1919 = vmul.f32 %v1847, %v1903
        %v1920 = vmul.f32 %v1849, %v1904
        %v1921 = vmul.f32 %v1851, %v1905
        %v1922 = vmul.f32 %v1853, %v1906
        %v1923 = vmul.f32 %v1855, %v1907
        %v1924 = vmul.f32 %v1857, %v1908
        %v1925 = vmul.f32 %v1859, %v1909
        %v1926 = vmul.f32 %v1861, %v1910
        %v1927 = vmul.f32 %v1863, %v1911
        %v1928 = vpack.c.bf16 %v1913, %v1912
        %v1929 = vpack.c.bf16 %v1915, %v1914
        %v1930 = vpack.c.bf16 %v1917, %v1916
        %v1931 = vpack.c.bf16 %v1919, %v1918
        %v1932 = vpack.c.bf16 %v1921, %v1920
        %v1933 = vpack.c.bf16 %v1923, %v1922
        %v1934 = vpack.c.bf16 %v1925, %v1924
        %v1935 = vpack.c.bf16 %v1927, %v1926
        %1936 = vrot.lane.b32.xlu0 %v647, 64
        %v1937 = vpop.permute.xlu0 %1936
        %1938 = vrot.lane.b32.xlu0 %v648, 64
        %v1939 = vpop.permute.xlu0 %1938
        %1940 = vrot.lane.b32.xlu0 %v649, 64
        %v1941 = vpop.permute.xlu0 %1940
        %1942 = vrot.lane.b32.xlu0 %v650, 64
        %v1943 = vpop.permute.xlu0 %1942
        %1944 = vrot.lane.b32.xlu0 %v651, 64
        %v1945 = vpop.permute.xlu0 %1944
        %1946 = vrot.lane.b32.xlu0 %v652, 64
        %v1947 = vpop.permute.xlu0 %1946
        %1948 = vrot.lane.b32.xlu0 %v653, 64
        %v1949 = vpop.permute.xlu0 %1948
        %1950 = vrot.lane.b32.xlu0 %v654, 64
        %v1951 = vpop.permute.xlu0 %1950
        %1960 = vmatprep.subr.bf16.mxu0 0
        %1961 = vmatpush1.bf16.msra.mxu0 %v1937
        %1962 = vmatprep.subr.bf16.mxu0 0
        %1963 = vmatpush1.bf16.msra.mxu0 %v1939
        %1964 = vmatprep.subr.bf16.mxu0 0
        %1965 = vmatpush1.bf16.msra.mxu0 %v1941
        %1966 = vmatprep.subr.bf16.mxu0 0
        %1967 = vmatpush1.bf16.msra.mxu0 %v1943
        %1968 = vmatprep.subr.bf16.mxu0 0
        %1969 = vmatpush1.bf16.msra.mxu0 %v1945
        %1970 = vmatprep.subr.bf16.mxu0 0
        %1971 = vmatpush1.bf16.msra.mxu0 %v1947
        %1972 = vmatprep.subr.bf16.mxu0 0
        %1973 = vmatpush1.bf16.msra.mxu0 %v1949
        %1974 = vmatprep.subr.bf16.mxu0 0
        %1975 = vmatpush1.bf16.msra.mxu0 %v1951
        %1976 = vmatprep.subr.bf16.mxu0 0
        %1977 = vmatpush1.bf16.msra.mxu0 0
        %1978 = vmatprep.subr.bf16.mxu0 0
        %1979 = vmatpush1.bf16.msra.mxu0 0
        %1980 = vmatprep.subr.bf16.mxu0 0
        %1981 = vmatpush1.bf16.msra.mxu0 0
        %1982 = vmatprep.subr.bf16.mxu0 0
        %1983 = vmatpush1.bf16.msra.mxu0 0
        %1984 = vmatprep.subr.bf16.mxu0 0
        %1985 = vmatpush1.bf16.msra.mxu0 0
        %1986 = vmatprep.subr.bf16.mxu0 0
        %1987 = vmatpush1.bf16.msra.mxu0 0
        %1988 = vmatprep.subr.bf16.mxu0 0
        %1989 = vmatpush1.bf16.msra.mxu0 0
        %1990 = vmatprep.subr.bf16.mxu0 0
        %1991 = vmatpush1.bf16.msra.mxu0 0
        %1992 = vmatprep.mubr.bf16.mxu0 0
        %1993 = vmatmul.mubr.bf16.gmra.mrb[0].mxu0 %v1928
        %v1994 = vpop.f32.mrb[0].mxu0
        %v1995 = vadd.f32 0.0, %v1994
        %v1996 = vpop.f32.mrb[0].mxu0
        %v1997 = vpop.f32.mrb[0].mxu0
        %v1998 = vadd.f32 0.0, %v1997
        %v1999 = vpop.f32.mrb[0].mxu0
        %2000 = vmatprep.mubr.bf16.mxu0 0
        %2001 = vmatmul.mubr.bf16.gmra.mrb[0].mxu0 %v1929
        %v2002 = vpop.f32.mrb[0].mxu0
        %v2003 = vadd.f32 0.0, %v2002
        %v2004 = vpop.f32.mrb[0].mxu0
        %v2005 = vpop.f32.mrb[0].mxu0
        %v2006 = vadd.f32 0.0, %v2005
        %v2007 = vpop.f32.mrb[0].mxu0
        %2008 = vmatprep.mubr.bf16.mxu0 0
        %2009 = vmatmul.mubr.bf16.gmra.mrb[0].mxu0 %v1930
        %v2010 = vpop.f32.mrb[0].mxu0
        %v2011 = vadd.f32 0.0, %v2010
        %v2012 = vpop.f32.mrb[0].mxu0
        %v2013 = vpop.f32.mrb[0].mxu0
        %v2014 = vadd.f32 0.0, %v2013
        %v2015 = vpop.f32.mrb[0].mxu0
        %2016 = vmatprep.mubr.bf16.mxu0 0
        %2017 = vmatmul.mubr.bf16.gmra.mrb[0].mxu0 %v1931
        %v2018 = vpop.f32.mrb[0].mxu0
        %v2019 = vadd.f32 0.0, %v2018
        %v2020 = vpop.f32.mrb[0].mxu0
        %v2021 = vpop.f32.mrb[0].mxu0
        %v2022 = vadd.f32 0.0, %v2021
        %v2023 = vpop.f32.mrb[0].mxu0
        %2024 = vmatprep.mubr.bf16.mxu0 0
        %2025 = vmatmul.mubr.bf16.gmra.mrb[0].mxu0 %v1932
        %v2026 = vpop.f32.mrb[0].mxu0
        %v2027 = vadd.f32 0.0, %v2026
        %v2028 = vpop.f32.mrb[0].mxu0
        %v2029 = vpop.f32.mrb[0].mxu0
        %v2030 = vadd.f32 0.0, %v2029
        %v2031 = vpop.f32.mrb[0].mxu0
        %2032 = vmatprep.mubr.bf16.mxu0 0
        %2033 = vmatmul.mubr.bf16.gmra.mrb[0].mxu0 %v1933
        %v2034 = vpop.f32.mrb[0].mxu0
        %v2035 = vadd.f32 0.0, %v2034
        %v2036 = vpop.f32.mrb[0].mxu0
        %v2037 = vpop.f32.mrb[0].mxu0
        %v2038 = vadd.f32 0.0, %v2037
        %v2039 = vpop.f32.mrb[0].mxu0
        %2040 = vmatprep.mubr.bf16.mxu0 0
        %2041 = vmatmul.mubr.bf16.gmra.mrb[0].mxu0 %v1934
        %v2042 = vpop.f32.mrb[0].mxu0
        %v2043 = vadd.f32 0.0, %v2042
        %v2044 = vpop.f32.mrb[0].mxu0
        %v2045 = vpop.f32.mrb[0].mxu0
        %v2046 = vadd.f32 0.0, %v2045
        %v2047 = vpop.f32.mrb[0].mxu0
        %2048 = vmatprep.mubr.bf16.mxu0 0
        %2049 = vmatmul.mubr.bf16.gmra.mrb[0].mxu0 %v1935
        %v2050 = vpop.f32.mrb[0].mxu0
        %v2051 = vadd.f32 0.0, %v2050
        %v2052 = vpop.f32.mrb[0].mxu0
        %v2053 = vpop.f32.mrb[0].mxu0
        %v2054 = vadd.f32 0.0, %v2053
        %v2055 = vpop.f32.mrb[0].mxu0
        %2056 = vdwg.mxu0
        %2057 = vrot.lane.b32.xlu0 %v631, 32
        %v2058 = vpop.permute.xlu0 %2057
        %2059 = vrot.lane.b32.xlu0 %v632, 32
        %v2060 = vpop.permute.xlu0 %2059
        %2061 = vrot.lane.b32.xlu0 %v633, 32
        %v2062 = vpop.permute.xlu0 %2061
        %2063 = vrot.lane.b32.xlu0 %v634, 32
        %v2064 = vpop.permute.xlu0 %2063
        %2065 = vrot.lane.b32.xlu0 %v635, 32
        %v2066 = vpop.permute.xlu0 %2065
        %2067 = vrot.lane.b32.xlu0 %v636, 32
        %v2068 = vpop.permute.xlu0 %2067
        %2069 = vrot.lane.b32.xlu0 %v637, 32
        %v2070 = vpop.permute.xlu0 %2069
        %2071 = vrot.lane.b32.xlu0 %v638, 32
        %v2072 = vpop.permute.xlu0 %2071
        %2073 = vrot.lane.b32.xlu0 %v639, 32
        %v2074 = vpop.permute.xlu0 %2073
        %2075 = vrot.lane.b32.xlu0 %v640, 32
        %v2076 = vpop.permute.xlu0 %2075
        %2077 = vrot.lane.b32.xlu0 %v641, 32
        %v2078 = vpop.permute.xlu0 %2077
        %2079 = vrot.lane.b32.xlu0 %v642, 32
        %v2080 = vpop.permute.xlu0 %2079
        %2081 = vrot.lane.b32.xlu0 %v643, 32
        %v2082 = vpop.permute.xlu0 %2081
        %2083 = vrot.lane.b32.xlu0 %v644, 32
        %v2084 = vpop.permute.xlu0 %2083
        %2085 = vrot.lane.b32.xlu0 %v645, 32
        %v2086 = vpop.permute.xlu0 %2085
        %2087 = vrot.lane.b32.xlu0 %v646, 32
        %v2088 = vpop.permute.xlu0 %2087
        %v2090 = vsel %vm690, %v2058, 0
        %v2093 = vsel %vm690, %v2060, 0
        %v2096 = vsel %vm690, %v2062, 0
        %v2099 = vsel %vm690, %v2064, 0
        %v2102 = vsel %vm690, %v2066, 0
        %v2105 = vsel %vm690, %v2068, 0
        %v2108 = vsel %vm690, %v2070, 0
        %v2111 = vsel %vm690, %v2072, 0
        %v2114 = vsel %vm690, %v2074, 0
        %v2117 = vsel %vm690, %v2076, 0
        %v2120 = vsel %vm690, %v2078, 0
        %v2123 = vsel %vm690, %v2080, 0
        %v2126 = vsel %vm690, %v2082, 0
        %v2129 = vsel %vm690, %v2084, 0
        %v2132 = vsel %vm690, %v2086, 0
        %v2135 = vsel %vm690, %v2088, 0
        %2137 = vmatprep.subr.bf16.mxu0 0
        %2138 = vmatpush1.bf16.xpose.msra.mxu0 %v2114
        %2139 = vmatprep.subr.bf16.mxu0 0
        %2140 = vmatpush1.bf16.xpose.msra.mxu0 %v2117
        %2141 = vmatprep.subr.bf16.mxu0 0
        %2142 = vmatpush1.bf16.xpose.msra.mxu0 %v2120
        %2143 = vmatprep.subr.bf16.mxu0 0
        %2144 = vmatpush1.bf16.xpose.msra.mxu0 %v2123
        %2145 = vmatprep.subr.bf16.mxu0 0
        %2146 = vmatpush1.bf16.xpose.msra.mxu0 %v2126
        %2147 = vmatprep.subr.bf16.mxu0 0
        %2148 = vmatpush1.bf16.xpose.msra.mxu0 %v2129
        %2149 = vmatprep.subr.bf16.mxu0 0
        %2150 = vmatpush1.bf16.xpose.msra.mxu0 %v2132
        %2151 = vmatprep.subr.bf16.mxu0 0
        %2152 = vmatpush1.bf16.xpose.msra.mxu0 %v2135
        %2153 = vmatprep.subr.bf16.mxu0 0
        %2154 = vmatpush1.bf16.xpose.msra.mxu0 0
        %2155 = vmatprep.subr.bf16.mxu0 0
        %2156 = vmatpush1.bf16.xpose.msra.mxu0 0
        %2157 = vmatprep.subr.bf16.mxu0 0
        %2158 = vmatpush1.bf16.xpose.msra.mxu0 0
        %2159 = vmatprep.subr.bf16.mxu0 0
        %2160 = vmatpush1.bf16.xpose.msra.mxu0 0
        %2161 = vmatprep.subr.bf16.mxu0 0
        %2162 = vmatpush1.bf16.xpose.msra.mxu0 0
        %2163 = vmatprep.subr.bf16.mxu0 0
        %2164 = vmatpush1.bf16.xpose.msra.mxu0 0
        %2165 = vmatprep.subr.bf16.mxu0 0
        %2166 = vmatpush1.bf16.xpose.msra.mxu0 0
        %2167 = vmatprep.subr.bf16.mxu0 0
        %2168 = vmatpush1.bf16.xpose.msra.mxu0 0
        %2169 = vmatprep.mubr.bf16.mxu0 0
        %2170 = vmatmul.mubr.bf16.gmra.mrb[0].mxu0 %v2090
        %v2171 = vpop.f32.mrb[0].mxu0
        %v2172 = vadd.f32 0.0, %v2171
        %v2173 = vpop.f32.mrb[0].mxu0
        %v2174 = vpop.f32.mrb[0].mxu0
        %v2175 = vadd.f32 0.0, %v2174
        %v2176 = vpop.f32.mrb[0].mxu0
        %2177 = vmatprep.mubr.bf16.mxu0 0
        %2178 = vmatmul.mubr.bf16.gmra.mrb[0].mxu0 %v2093
        %v2179 = vpop.f32.mrb[0].mxu0
        %v2180 = vadd.f32 0.0, %v2179
        %v2181 = vpop.f32.mrb[0].mxu0
        %v2182 = vpop.f32.mrb[0].mxu0
        %v2183 = vadd.f32 0.0, %v2182
        %v2184 = vpop.f32.mrb[0].mxu0
        %2185 = vmatprep.mubr.bf16.mxu0 0
        %2186 = vmatmul.mubr.bf16.gmra.mrb[0].mxu0 %v2096
        %v2187 = vpop.f32.mrb[0].mxu0
        %v2188 = vadd.f32 0.0, %v2187
        %v2189 = vpop.f32.mrb[0].mxu0
        %v2190 = vpop.f32.mrb[0].mxu0
        %v2191 = vadd.f32 0.0, %v2190
        %v2192 = vpop.f32.mrb[0].mxu0
        %2193 = vmatprep.mubr.bf16.mxu0 0
        %2194 = vmatmul.mubr.bf16.gmra.mrb[0].mxu0 %v2099
        %v2195 = vpop.f32.mrb[0].mxu0
        %v2196 = vadd.f32 0.0, %v2195
        %v2197 = vpop.f32.mrb[0].mxu0
        %v2198 = vpop.f32.mrb[0].mxu0
        %v2199 = vadd.f32 0.0, %v2198
        %v2200 = vpop.f32.mrb[0].mxu0
        %2201 = vmatprep.mubr.bf16.mxu0 0
        %2202 = vmatmul.mubr.bf16.gmra.mrb[0].mxu0 %v2102
        %v2203 = vpop.f32.mrb[0].mxu0
        %v2204 = vadd.f32 0.0, %v2203
        %v2205 = vpop.f32.mrb[0].mxu0
        %v2206 = vpop.f32.mrb[0].mxu0
        %v2207 = vadd.f32 0.0, %v2206
        %v2208 = vpop.f32.mrb[0].mxu0
        %2209 = vmatprep.mubr.bf16.mxu0 0
        %2210 = vmatmul.mubr.bf16.gmra.mrb[0].mxu0 %v2105
        %v2211 = vpop.f32.mrb[0].mxu0
        %v2212 = vadd.f32 0.0, %v2211
        %v2213 = vpop.f32.mrb[0].mxu0
        %v2214 = vpop.f32.mrb[0].mxu0
        %v2215 = vadd.f32 0.0, %v2214
        %v2216 = vpop.f32.mrb[0].mxu0
        %2217 = vmatprep.mubr.bf16.mxu0 0
        %2218 = vmatmul.mubr.bf16.gmra.mrb[0].mxu0 %v2108
        %v2219 = vpop.f32.mrb[0].mxu0
        %v2220 = vadd.f32 0.0, %v2219
        %v2221 = vpop.f32.mrb[0].mxu0
        %v2222 = vpop.f32.mrb[0].mxu0
        %v2223 = vadd.f32 0.0, %v2222
        %v2224 = vpop.f32.mrb[0].mxu0
        %2225 = vmatprep.mubr.bf16.mxu0 0
        %2226 = vmatmul.mubr.bf16.gmra.mrb[0].mxu0 %v2111
        %v2227 = vpop.f32.mrb[0].mxu0
        %v2228 = vadd.f32 0.0, %v2227
        %v2229 = vpop.f32.mrb[0].mxu0
        %v2230 = vpop.f32.mrb[0].mxu0
        %v2231 = vadd.f32 0.0, %v2230
        %v2232 = vpop.f32.mrb[0].mxu0
        %2233 = vdwg.mxu0
        %v2234 = vsel %vm674, %v2172, -1e+30
        %v2235 = vsel %vm675, %v2175, -1e+30
        %v2236 = vsel %vm676, %v2180, -1e+30
        %v2237 = vsel %vm677, %v2183, -1e+30
        %v2238 = vsel %vm678, %v2188, -1e+30
        %v2239 = vsel %vm679, %v2191, -1e+30
        %v2240 = vsel %vm680, %v2196, -1e+30
        %v2241 = vsel %vm681, %v2199, -1e+30
        %v2242 = vsel %vm682, %v2204, -1e+30
        %v2243 = vsel %vm683, %v2207, -1e+30
        %v2244 = vsel %vm684, %v2212, -1e+30
        %v2245 = vsel %vm685, %v2215, -1e+30
        %v2246 = vsel %vm686, %v2220, -1e+30
        %v2247 = vsel %vm687, %v2223, -1e+30
        %v2248 = vsel %vm688, %v2228, -1e+30
        %v2249 = vsel %vm689, %v2231, -1e+30
        %2250 = vmax.xlane.f32.xlu0 %v2234
        %v2251 = vpop.xlane.xlu0 %2250
        %2252 = vmax.xlane.f32.xlu0 %v2235
        %v2253 = vpop.xlane.xlu0 %2252
        %2254 = vmax.xlane.f32.xlu0 %v2236
        %v2255 = vpop.xlane.xlu0 %2254
        %2256 = vmax.xlane.f32.xlu0 %v2237
        %v2257 = vpop.xlane.xlu0 %2256
        %2258 = vmax.xlane.f32.xlu0 %v2238
        %v2259 = vpop.xlane.xlu0 %2258
        %2260 = vmax.xlane.f32.xlu0 %v2239
        %v2261 = vpop.xlane.xlu0 %2260
        %2262 = vmax.xlane.f32.xlu0 %v2240
        %v2263 = vpop.xlane.xlu0 %2262
        %2264 = vmax.xlane.f32.xlu0 %v2241
        %v2265 = vpop.xlane.xlu0 %2264
        %2266 = vmax.xlane.f32.xlu0 %v2242
        %v2267 = vpop.xlane.xlu0 %2266
        %2268 = vmax.xlane.f32.xlu0 %v2243
        %v2269 = vpop.xlane.xlu0 %2268
        %2270 = vmax.xlane.f32.xlu0 %v2244
        %v2271 = vpop.xlane.xlu0 %2270
        %2272 = vmax.xlane.f32.xlu0 %v2245
        %v2273 = vpop.xlane.xlu0 %2272
        %2274 = vmax.xlane.f32.xlu0 %v2246
        %v2275 = vpop.xlane.xlu0 %2274
        %2276 = vmax.xlane.f32.xlu0 %v2247
        %v2277 = vpop.xlane.xlu0 %2276
        %2278 = vmax.xlane.f32.xlu0 %v2248
        %v2279 = vpop.xlane.xlu0 %2278
        %2280 = vmax.xlane.f32.xlu0 %v2249
        %v2281 = vpop.xlane.xlu0 %2280
        %v2282 = vsub.f32 %v2234, %v2251
        %v2283 = vsub.f32 %v2235, %v2253
        %v2284 = vsub.f32 %v2236, %v2255
        %v2285 = vsub.f32 %v2237, %v2257
        %v2286 = vsub.f32 %v2238, %v2259
        %v2287 = vsub.f32 %v2239, %v2261
        %v2288 = vsub.f32 %v2240, %v2263
        %v2289 = vsub.f32 %v2241, %v2265
        %v2290 = vsub.f32 %v2242, %v2267
        %v2291 = vsub.f32 %v2243, %v2269
        %v2292 = vsub.f32 %v2244, %v2271
        %v2293 = vsub.f32 %v2245, %v2273
        %v2294 = vsub.f32 %v2246, %v2275
        %v2295 = vsub.f32 %v2247, %v2277
        %v2296 = vsub.f32 %v2248, %v2279
        %v2297 = vsub.f32 %v2249, %v2281
        %v2298 = vmul.f32 %v2282, 1.442695
        %v2299 = vpow.pop %v2298
        %v2300 = vmul.f32 %v2283, 1.442695
        %v2301 = vpow.pop %v2300
        %v2302 = vmul.f32 %v2284, 1.442695
        %v2303 = vpow.pop %v2302
        %v2304 = vmul.f32 %v2285, 1.442695
        %v2305 = vpow.pop %v2304
        %v2306 = vmul.f32 %v2286, 1.442695
        %v2307 = vpow.pop %v2306
        %v2308 = vmul.f32 %v2287, 1.442695
        %v2309 = vpow.pop %v2308
        %v2310 = vmul.f32 %v2288, 1.442695
        %v2311 = vpow.pop %v2310
        %v2312 = vmul.f32 %v2289, 1.442695
        %v2313 = vpow.pop %v2312
        %v2314 = vmul.f32 %v2290, 1.442695
        %v2315 = vpow.pop %v2314
        %v2316 = vmul.f32 %v2291, 1.442695
        %v2317 = vpow.pop %v2316
        %v2318 = vmul.f32 %v2292, 1.442695
        %v2319 = vpow.pop %v2318
        %v2320 = vmul.f32 %v2293, 1.442695
        %v2321 = vpow.pop %v2320
        %v2322 = vmul.f32 %v2294, 1.442695
        %v2323 = vpow.pop %v2322
        %v2324 = vmul.f32 %v2295, 1.442695
        %v2325 = vpow.pop %v2324
        %v2326 = vmul.f32 %v2296, 1.442695
        %v2327 = vpow.pop %v2326
        %v2328 = vmul.f32 %v2297, 1.442695
        %v2329 = vpow.pop %v2328
        %2330 = vadd.xlane.f32.xlu0 %v2299
        %v2331 = vpop.xlane.xlu0 %2330
        %2332 = vadd.xlane.f32.xlu0 %v2301
        %v2333 = vpop.xlane.xlu0 %2332
        %2334 = vadd.xlane.f32.xlu0 %v2303
        %v2335 = vpop.xlane.xlu0 %2334
        %2336 = vadd.xlane.f32.xlu0 %v2305
        %v2337 = vpop.xlane.xlu0 %2336
        %2338 = vadd.xlane.f32.xlu0 %v2307
        %v2339 = vpop.xlane.xlu0 %2338
        %2340 = vadd.xlane.f32.xlu0 %v2309
        %v2341 = vpop.xlane.xlu0 %2340
        %2342 = vadd.xlane.f32.xlu0 %v2311
        %v2343 = vpop.xlane.xlu0 %2342
        %2344 = vadd.xlane.f32.xlu0 %v2313
        %v2345 = vpop.xlane.xlu0 %2344
        %2346 = vadd.xlane.f32.xlu0 %v2315
        %v2347 = vpop.xlane.xlu0 %2346
        %2348 = vadd.xlane.f32.xlu0 %v2317
        %v2349 = vpop.xlane.xlu0 %2348
        %2350 = vadd.xlane.f32.xlu0 %v2319
        %v2351 = vpop.xlane.xlu0 %2350
        %2352 = vadd.xlane.f32.xlu0 %v2321
        %v2353 = vpop.xlane.xlu0 %2352
        %2354 = vadd.xlane.f32.xlu0 %v2323
        %v2355 = vpop.xlane.xlu0 %2354
        %2356 = vadd.xlane.f32.xlu0 %v2325
        %v2357 = vpop.xlane.xlu0 %2356
        %2358 = vadd.xlane.f32.xlu0 %v2327
        %v2359 = vpop.xlane.xlu0 %2358
        %2360 = vadd.xlane.f32.xlu0 %v2329
        %v2361 = vpop.xlane.xlu0 %2360
        %v2362 = vrcp.pop %v2331
        %v2363 = vrcp.pop %v2333
        %v2364 = vrcp.pop %v2335
        %v2365 = vrcp.pop %v2337
        %v2366 = vrcp.pop %v2339
        %v2367 = vrcp.pop %v2341
        %v2368 = vrcp.pop %v2343
        %v2369 = vrcp.pop %v2345
        %v2370 = vrcp.pop %v2347
        %v2371 = vrcp.pop %v2349
        %v2372 = vrcp.pop %v2351
        %v2373 = vrcp.pop %v2353
        %v2374 = vrcp.pop %v2355
        %v2375 = vrcp.pop %v2357
        %v2376 = vrcp.pop %v2359
        %v2377 = vrcp.pop %v2361
        %v2378 = vmul.f32 %v2299, %v2362
        %v2379 = vmul.f32 %v2301, %v2363
        %v2380 = vmul.f32 %v2303, %v2364
        %v2381 = vmul.f32 %v2305, %v2365
        %v2382 = vmul.f32 %v2307, %v2366
        %v2383 = vmul.f32 %v2309, %v2367
        %v2384 = vmul.f32 %v2311, %v2368
        %v2385 = vmul.f32 %v2313, %v2369
        %v2386 = vmul.f32 %v2315, %v2370
        %v2387 = vmul.f32 %v2317, %v2371
        %v2388 = vmul.f32 %v2319, %v2372
        %v2389 = vmul.f32 %v2321, %v2373
        %v2390 = vmul.f32 %v2323, %v2374
        %v2391 = vmul.f32 %v2325, %v2375
        %v2392 = vmul.f32 %v2327, %v2376
        %v2393 = vmul.f32 %v2329, %v2377
        %v2394 = vpack.c.bf16 %v2379, %v2378
        %v2395 = vpack.c.bf16 %v2381, %v2380
        %v2396 = vpack.c.bf16 %v2383, %v2382
        %v2397 = vpack.c.bf16 %v2385, %v2384
        %v2398 = vpack.c.bf16 %v2387, %v2386
        %v2399 = vpack.c.bf16 %v2389, %v2388
        %v2400 = vpack.c.bf16 %v2391, %v2390
        %v2401 = vpack.c.bf16 %v2393, %v2392
        %2402 = vrot.lane.b32.xlu0 %v647, 32
        %v2403 = vpop.permute.xlu0 %2402
        %2404 = vrot.lane.b32.xlu0 %v648, 32
        %v2405 = vpop.permute.xlu0 %2404
        %2406 = vrot.lane.b32.xlu0 %v649, 32
        %v2407 = vpop.permute.xlu0 %2406
        %2408 = vrot.lane.b32.xlu0 %v650, 32
        %v2409 = vpop.permute.xlu0 %2408
        %2410 = vrot.lane.b32.xlu0 %v651, 32
        %v2411 = vpop.permute.xlu0 %2410
        %2412 = vrot.lane.b32.xlu0 %v652, 32
        %v2413 = vpop.permute.xlu0 %2412
        %2414 = vrot.lane.b32.xlu0 %v653, 32
        %v2415 = vpop.permute.xlu0 %2414
        %2416 = vrot.lane.b32.xlu0 %v654, 32
        %v2417 = vpop.permute.xlu0 %2416
        %2426 = vmatprep.subr.bf16.mxu0 0
        %2427 = vmatpush1.bf16.msra.mxu0 %v2403
        %2428 = vmatprep.subr.bf16.mxu0 0
        %2429 = vmatpush1.bf16.msra.mxu0 %v2405
        %2430 = vmatprep.subr.bf16.mxu0 0
        %2431 = vmatpush1.bf16.msra.mxu0 %v2407
        %2432 = vmatprep.subr.bf16.mxu0 0
        %2433 = vmatpush1.bf16.msra.mxu0 %v2409
        %2434 = vmatprep.subr.bf16.mxu0 0
        %2435 = vmatpush1.bf16.msra.mxu0 %v2411
        %2436 = vmatprep.subr.bf16.mxu0 0
        %2437 = vmatpush1.bf16.msra.mxu0 %v2413
        %2438 = vmatprep.subr.bf16.mxu0 0
        %2439 = vmatpush1.bf16.msra.mxu0 %v2415
        %2440 = vmatprep.subr.bf16.mxu0 0
        %2441 = vmatpush1.bf16.msra.mxu0 %v2417
        %2442 = vmatprep.subr.bf16.mxu0 0
        %2443 = vmatpush1.bf16.msra.mxu0 0
        %2444 = vmatprep.subr.bf16.mxu0 0
        %2445 = vmatpush1.bf16.msra.mxu0 0
        %2446 = vmatprep.subr.bf16.mxu0 0
        %2447 = vmatpush1.bf16.msra.mxu0 0
        %2448 = vmatprep.subr.bf16.mxu0 0
        %2449 = vmatpush1.bf16.msra.mxu0 0
        %2450 = vmatprep.subr.bf16.mxu0 0
        %2451 = vmatpush1.bf16.msra.mxu0 0
        %2452 = vmatprep.subr.bf16.mxu0 0
        %2453 = vmatpush1.bf16.msra.mxu0 0
        %2454 = vmatprep.subr.bf16.mxu0 0
        %2455 = vmatpush1.bf16.msra.mxu0 0
        %2456 = vmatprep.subr.bf16.mxu0 0
        %2457 = vmatpush1.bf16.msra.mxu0 0
        %2458 = vmatprep.mubr.bf16.mxu0 0
        %2459 = vmatmul.mubr.bf16.gmra.mrb[0].mxu0 %v2394
        %v2460 = vpop.f32.mrb[0].mxu0
        %v2461 = vadd.f32 0.0, %v2460
        %v2462 = vpop.f32.mrb[0].mxu0
        %v2463 = vpop.f32.mrb[0].mxu0
        %v2464 = vadd.f32 0.0, %v2463
        %v2465 = vpop.f32.mrb[0].mxu0
        %2466 = vmatprep.mubr.bf16.mxu0 0
        %2467 = vmatmul.mubr.bf16.gmra.mrb[0].mxu0 %v2395
        %v2468 = vpop.f32.mrb[0].mxu0
        %v2469 = vadd.f32 0.0, %v2468
        %v2470 = vpop.f32.mrb[0].mxu0
        %v2471 = vpop.f32.mrb[0].mxu0
        %v2472 = vadd.f32 0.0, %v2471
        %v2473 = vpop.f32.mrb[0].mxu0
        %2474 = vmatprep.mubr.bf16.mxu0 0
        %2475 = vmatmul.mubr.bf16.gmra.mrb[0].mxu0 %v2396
        %v2476 = vpop.f32.mrb[0].mxu0
        %v2477 = vadd.f32 0.0, %v2476
        %v2478 = vpop.f32.mrb[0].mxu0
        %v2479 = vpop.f32.mrb[0].mxu0
        %v2480 = vadd.f32 0.0, %v2479
        %v2481 = vpop.f32.mrb[0].mxu0
        %2482 = vmatprep.mubr.bf16.mxu0 0
        %2483 = vmatmul.mubr.bf16.gmra.mrb[0].mxu0 %v2397
        %v2484 = vpop.f32.mrb[0].mxu0
        %v2485 = vadd.f32 0.0, %v2484
        %v2486 = vpop.f32.mrb[0].mxu0
        %v2487 = vpop.f32.mrb[0].mxu0
        %v2488 = vadd.f32 0.0, %v2487
        %v2489 = vpop.f32.mrb[0].mxu0
        %2490 = vmatprep.mubr.bf16.mxu0 0
        %2491 = vmatmul.mubr.bf16.gmra.mrb[0].mxu0 %v2398
        %v2492 = vpop.f32.mrb[0].mxu0
        %v2493 = vadd.f32 0.0, %v2492
        %v2494 = vpop.f32.mrb[0].mxu0
        %v2495 = vpop.f32.mrb[0].mxu0
        %v2496 = vadd.f32 0.0, %v2495
        %v2497 = vpop.f32.mrb[0].mxu0
        %2498 = vmatprep.mubr.bf16.mxu0 0
        %2499 = vmatmul.mubr.bf16.gmra.mrb[0].mxu0 %v2399
        %v2500 = vpop.f32.mrb[0].mxu0
        %v2501 = vadd.f32 0.0, %v2500
        %v2502 = vpop.f32.mrb[0].mxu0
        %v2503 = vpop.f32.mrb[0].mxu0
        %v2504 = vadd.f32 0.0, %v2503
        %v2505 = vpop.f32.mrb[0].mxu0
        %2506 = vmatprep.mubr.bf16.mxu0 0
        %2507 = vmatmul.mubr.bf16.gmra.mrb[0].mxu0 %v2400
        %v2508 = vpop.f32.mrb[0].mxu0
        %v2509 = vadd.f32 0.0, %v2508
        %v2510 = vpop.f32.mrb[0].mxu0
        %v2511 = vpop.f32.mrb[0].mxu0
        %v2512 = vadd.f32 0.0, %v2511
        %v2513 = vpop.f32.mrb[0].mxu0
        %2514 = vmatprep.mubr.bf16.mxu0 0
        %2515 = vmatmul.mubr.bf16.gmra.mrb[0].mxu0 %v2401
        %v2516 = vpop.f32.mrb[0].mxu0
        %v2517 = vadd.f32 0.0, %v2516
        %v2518 = vpop.f32.mrb[0].mxu0
        %v2519 = vpop.f32.mrb[0].mxu0
        %v2520 = vadd.f32 0.0, %v2519
        %v2521 = vpop.f32.mrb[0].mxu0
        %2522 = vdwg.mxu0
        %2539 = vrot.lane.b32.xlu0 %v1529, 32
        %v2540 = vpop.permute.xlu0 %2539
        %2541 = vrot.lane.b32.xlu0 %v1532, 32
        %v2542 = vpop.permute.xlu0 %2541
        %2543 = vrot.lane.b32.xlu0 %v1537, 32
        %v2544 = vpop.permute.xlu0 %2543
        %2545 = vrot.lane.b32.xlu0 %v1540, 32
        %v2546 = vpop.permute.xlu0 %2545
        %2547 = vrot.lane.b32.xlu0 %v1545, 32
        %v2548 = vpop.permute.xlu0 %2547
        %2549 = vrot.lane.b32.xlu0 %v1548, 32
        %v2550 = vpop.permute.xlu0 %2549
        %2551 = vrot.lane.b32.xlu0 %v1553, 32
        %v2552 = vpop.permute.xlu0 %2551
        %2553 = vrot.lane.b32.xlu0 %v1556, 32
        %v2554 = vpop.permute.xlu0 %2553
        %2555 = vrot.lane.b32.xlu0 %v1561, 32
        %v2556 = vpop.permute.xlu0 %2555
        %2557 = vrot.lane.b32.xlu0 %v1564, 32
        %v2558 = vpop.permute.xlu0 %2557
        %2559 = vrot.lane.b32.xlu0 %v1569, 32
        %v2560 = vpop.permute.xlu0 %2559
        %2561 = vrot.lane.b32.xlu0 %v1572, 32
        %v2562 = vpop.permute.xlu0 %2561
        %2563 = vrot.lane.b32.xlu0 %v1577, 32
        %v2564 = vpop.permute.xlu0 %2563
        %2565 = vrot.lane.b32.xlu0 %v1580, 32
        %v2566 = vpop.permute.xlu0 %2565
        %2567 = vrot.lane.b32.xlu0 %v1585, 32
        %v2568 = vpop.permute.xlu0 %2567
        %2569 = vrot.lane.b32.xlu0 %v1588, 32
        %v2570 = vpop.permute.xlu0 %2569
        %2603 = vrot.lane.b32.xlu0 %v1995, 64
        %v2604 = vpop.permute.xlu0 %2603
        %2605 = vrot.lane.b32.xlu0 %v1998, 64
        %v2606 = vpop.permute.xlu0 %2605
        %2607 = vrot.lane.b32.xlu0 %v2003, 64
        %v2608 = vpop.permute.xlu0 %2607
        %2609 = vrot.lane.b32.xlu0 %v2006, 64
        %v2610 = vpop.permute.xlu0 %2609
        %2611 = vrot.lane.b32.xlu0 %v2011, 64
        %v2612 = vpop.permute.xlu0 %2611
        %2613 = vrot.lane.b32.xlu0 %v2014, 64
        %v2614 = vpop.permute.xlu0 %2613
        %2615 = vrot.lane.b32.xlu0 %v2019, 64
        %v2616 = vpop.permute.xlu0 %2615
        %2617 = vrot.lane.b32.xlu0 %v2022, 64
        %v2618 = vpop.permute.xlu0 %2617
        %2619 = vrot.lane.b32.xlu0 %v2027, 64
        %v2620 = vpop.permute.xlu0 %2619
        %2621 = vrot.lane.b32.xlu0 %v2030, 64
        %v2622 = vpop.permute.xlu0 %2621
        %2623 = vrot.lane.b32.xlu0 %v2035, 64
        %v2624 = vpop.permute.xlu0 %2623
        %2625 = vrot.lane.b32.xlu0 %v2038, 64
        %v2626 = vpop.permute.xlu0 %2625
        %2627 = vrot.lane.b32.xlu0 %v2043, 64
        %v2628 = vpop.permute.xlu0 %2627
        %2629 = vrot.lane.b32.xlu0 %v2046, 64
        %v2630 = vpop.permute.xlu0 %2629
        %2631 = vrot.lane.b32.xlu0 %v2051, 64
        %v2632 = vpop.permute.xlu0 %2631
        %2633 = vrot.lane.b32.xlu0 %v2054, 64
        %v2634 = vpop.permute.xlu0 %2633
        %2667 = vrot.lane.b32.xlu0 %v2461, 96
        %v2668 = vpop.permute.xlu0 %2667
        %2669 = vrot.lane.b32.xlu0 %v2464, 96
        %v2670 = vpop.permute.xlu0 %2669
        %2671 = vrot.lane.b32.xlu0 %v2469, 96
        %v2672 = vpop.permute.xlu0 %2671
        %2673 = vrot.lane.b32.xlu0 %v2472, 96
        %v2674 = vpop.permute.xlu0 %2673
        %2675 = vrot.lane.b32.xlu0 %v2477, 96
        %v2676 = vpop.permute.xlu0 %2675
        %2677 = vrot.lane.b32.xlu0 %v2480, 96
        %v2678 = vpop.permute.xlu0 %2677
        %2679 = vrot.lane.b32.xlu0 %v2485, 96
        %v2680 = vpop.permute.xlu0 %2679
        %2681 = vrot.lane.b32.xlu0 %v2488, 96
        %v2682 = vpop.permute.xlu0 %2681
        %2683 = vrot.lane.b32.xlu0 %v2493, 96
        %v2684 = vpop.permute.xlu0 %2683
        %2685 = vrot.lane.b32.xlu0 %v2496, 96
        %v2686 = vpop.permute.xlu0 %2685
        %2687 = vrot.lane.b32.xlu0 %v2501, 96
        %v2688 = vpop.permute.xlu0 %2687
        %2689 = vrot.lane.b32.xlu0 %v2504, 96
        %v2690 = vpop.permute.xlu0 %2689
        %2691 = vrot.lane.b32.xlu0 %v2509, 96
        %v2692 = vpop.permute.xlu0 %2691
        %2693 = vrot.lane.b32.xlu0 %v2512, 96
        %v2694 = vpop.permute.xlu0 %2693
        %2695 = vrot.lane.b32.xlu0 %v2517, 96
        %v2696 = vpop.permute.xlu0 %2695
        %2697 = vrot.lane.b32.xlu0 %v2520, 96
        %v2698 = vpop.permute.xlu0 %2697
        %v2715 = vsel %vm690, %v1039, %v2540
        %v2716 = vsel %vm690, %v1042, %v2542
        %v2717 = vsel %vm690, %v1047, %v2544
        %v2718 = vsel %vm690, %v1050, %v2546
        %v2719 = vsel %vm690, %v1055, %v2548
        %v2720 = vsel %vm690, %v1058, %v2550
        %v2721 = vsel %vm690, %v1063, %v2552
        %v2722 = vsel %vm690, %v1066, %v2554
        %v2723 = vsel %vm690, %v1071, %v2556
        %v2724 = vsel %vm690, %v1074, %v2558
        %v2725 = vsel %vm690, %v1079, %v2560
        %v2726 = vsel %vm690, %v1082, %v2562
        %v2727 = vsel %vm690, %v1087, %v2564
        %v2728 = vsel %vm690, %v1090, %v2566
        %v2729 = vsel %vm690, %v1095, %v2568
        %v2730 = vsel %vm690, %v1098, %v2570
        %vm2731 = vcmask 523264
        %v2732 = vsel %vm2731, %v2715, %v2604
        %v2733 = vsel %vm2731, %v2716, %v2606
        %v2734 = vsel %vm2731, %v2717, %v2608
        %v2735 = vsel %vm2731, %v2718, %v2610
        %v2736 = vsel %vm2731, %v2719, %v2612
        %v2737 = vsel %vm2731, %v2720, %v2614
        %v2738 = vsel %vm2731, %v2721, %v2616
        %v2739 = vsel %vm2731, %v2722, %v2618
        %v2740 = vsel %vm2731, %v2723, %v2620
        %v2741 = vsel %vm2731, %v2724, %v2622
        %v2742 = vsel %vm2731, %v2725, %v2624
        %v2743 = vsel %vm2731, %v2726, %v2626
        %v2744 = vsel %vm2731, %v2727, %v2628
        %v2745 = vsel %vm2731, %v2728, %v2630
        %v2746 = vsel %vm2731, %v2729, %v2632
        %v2747 = vsel %vm2731, %v2730, %v2634
        %vm2748 = vcmask 785408
        %v2749 = vsel %vm2748, %v2732, %v2668
        %v2750 = vsel %vm2748, %v2733, %v2670
        %v2751 = vsel %vm2748, %v2734, %v2672
        %v2752 = vsel %vm2748, %v2735, %v2674
        %v2753 = vsel %vm2748, %v2736, %v2676
        %v2754 = vsel %vm2748, %v2737, %v2678
        %v2755 = vsel %vm2748, %v2738, %v2680
        %v2756 = vsel %vm2748, %v2739, %v2682
        %v2757 = vsel %vm2748, %v2740, %v2684
        %v2758 = vsel %vm2748, %v2741, %v2686
        %v2759 = vsel %vm2748, %v2742, %v2688
        %v2760 = vsel %vm2748, %v2743, %v2690
        %v2761 = vsel %vm2748, %v2744, %v2692
        %v2762 = vsel %vm2748, %v2745, %v2694
        %v2763 = vsel %vm2748, %v2746, %v2696
        %v2764 = vsel %vm2748, %v2747, %v2698
        %v2765 = vpack.c.bf16 %v2750, %v2749
        %v2766 = vpack.c.bf16 %v2752, %v2751
        %v2767 = vpack.c.bf16 %v2754, %v2753
        %v2768 = vpack.c.bf16 %v2756, %v2755
        %v2769 = vpack.c.bf16 %v2758, %v2757
        %v2770 = vpack.c.bf16 %v2760, %v2759
        %v2771 = vpack.c.bf16 %v2762, %v2761
        %v2772 = vpack.c.bf16 %v2764, %v2763
        %v2773 = vld [vmem:[%s2] sm:$0xf]
        %v2774 = vld [vmem:[%s2 + $0x4] sm:$0xf]
        %v2775 = vld [vmem:[%s2 + $0x8] sm:$0xf]
        %v2776 = vld [vmem:[%s2 + $0xc] sm:$0xf]
        %v2777 = vld [vmem:[%s2 + $0x10] sm:$0xf]
        %v2778 = vld [vmem:[%s2 + $0x14] sm:$0xf]
        %v2779 = vld [vmem:[%s2 + $0x18] sm:$0xf]
        %v2780 = vld [vmem:[%s2 + $0x1c] sm:$0xf]
        %v2781 = vld [vmem:[%s2 + $0x20] sm:$0xf]
        %v2782 = vld [vmem:[%s2 + $0x24] sm:$0xf]
        %v2783 = vld [vmem:[%s2 + $0x28] sm:$0xf]
        %v2784 = vld [vmem:[%s2 + $0x2c] sm:$0xf]
        %v2785 = vld [vmem:[%s2 + $0x30] sm:$0xf]
        %v2786 = vld [vmem:[%s2 + $0x34] sm:$0xf]
        %v2787 = vld [vmem:[%s2 + $0x38] sm:$0xf]
        %v2788 = vld [vmem:[%s2 + $0x3c] sm:$0xf]
        %v2789 = vld [vmem:[%s3] sm:$0x1]
        %v2791 = vlaneseq
        %v2792 = vshrl.u32 %v2791, 7
        %v2793 = vsub.s32 0, %v2792
        %v2794 = vrot.slane %v2789, %v2793
        %v2812 = vunpack.c.l.b16 %v2773
        %v2813 = vunpack.c.l.b16 %v2774
        %v2814 = vunpack.c.l.b16 %v2775
        %v2815 = vunpack.c.l.b16 %v2776
        %v2816 = vunpack.c.l.b16 %v2777
        %v2817 = vunpack.c.l.b16 %v2778
        %v2818 = vunpack.c.l.b16 %v2779
        %v2819 = vunpack.c.l.b16 %v2780
        %v2820 = vunpack.c.l.b16 %v2781
        %v2821 = vunpack.c.l.b16 %v2782
        %v2822 = vunpack.c.l.b16 %v2783
        %v2823 = vunpack.c.l.b16 %v2784
        %v2824 = vunpack.c.l.b16 %v2785
        %v2825 = vunpack.c.l.b16 %v2786
        %v2826 = vunpack.c.l.b16 %v2787
        %v2827 = vunpack.c.l.b16 %v2788
        %v2828 = vpack.c.b16 %v2813, %v2812
        %v2829 = vpack.c.b16 %v2815, %v2814
        %v2830 = vpack.c.b16 %v2817, %v2816
        %v2831 = vpack.c.b16 %v2819, %v2818
        %v2832 = vpack.c.b16 %v2821, %v2820
        %v2833 = vpack.c.b16 %v2823, %v2822
        %v2834 = vpack.c.b16 %v2825, %v2824
        %v2835 = vpack.c.b16 %v2827, %v2826
        %2844 = vmatprep.subr.bf16.mxu0 0
        %2845 = vmatpush1.bf16.msra.mxu0 %v2828
        %2846 = vmatprep.subr.bf16.mxu0 0
        %2847 = vmatpush1.bf16.msra.mxu0 %v2829
        %2848 = vmatprep.subr.bf16.mxu0 0
        %2849 = vmatpush1.bf16.msra.mxu0 %v2830
        %2850 = vmatprep.subr.bf16.mxu0 0
        %2851 = vmatpush1.bf16.msra.mxu0 %v2831
        %2852 = vmatprep.subr.bf16.mxu0 0
        %2853 = vmatpush1.bf16.msra.mxu0 %v2832
        %2854 = vmatprep.subr.bf16.mxu0 0
        %2855 = vmatpush1.bf16.msra.mxu0 %v2833
        %2856 = vmatprep.subr.bf16.mxu0 0
        %2857 = vmatpush1.bf16.msra.mxu0 %v2834
        %2858 = vmatprep.subr.bf16.mxu0 0
        %2859 = vmatpush1.bf16.msra.mxu0 %v2835
        %2860 = vmatprep.subr.bf16.mxu0 0
        %2861 = vmatpush1.bf16.msra.mxu0 0
        %2862 = vmatprep.subr.bf16.mxu0 0
        %2863 = vmatpush1.bf16.msra.mxu0 0
        %2864 = vmatprep.subr.bf16.mxu0 0
        %2865 = vmatpush1.bf16.msra.mxu0 0
        %2866 = vmatprep.subr.bf16.mxu0 0
        %2867 = vmatpush1.bf16.msra.mxu0 0
        %2868 = vmatprep.subr.bf16.mxu0 0
        %2869 = vmatpush1.bf16.msra.mxu0 0
        %2870 = vmatprep.subr.bf16.mxu0 0
        %2871 = vmatpush1.bf16.msra.mxu0 0
        %2872 = vmatprep.subr.bf16.mxu0 0
        %2873 = vmatpush1.bf16.msra.mxu0 0
        %2874 = vmatprep.subr.bf16.mxu0 0
        %2875 = vmatpush1.bf16.msra.mxu0 0
        %2876 = vmatprep.mubr.bf16.mxu0 0
        %2877 = vmatmul.mubr.bf16.gmra.mrb[0].mxu0 %v2765
        %v2878 = vpop.f32.mrb[0].mxu0
        %v2879 = vadd.f32 %v2794, %v2878
        %v2880 = vpop.f32.mrb[0].mxu0
        %v2881 = vpop.f32.mrb[0].mxu0
        %v2882 = vadd.f32 %v2794, %v2881
        %v2883 = vpop.f32.mrb[0].mxu0
        %2884 = vmatprep.mubr.bf16.mxu0 0
        %2885 = vmatmul.mubr.bf16.gmra.mrb[0].mxu0 %v2766
        %v2886 = vpop.f32.mrb[0].mxu0
        %v2887 = vadd.f32 %v2794, %v2886
        %v2888 = vpop.f32.mrb[0].mxu0
        %v2889 = vpop.f32.mrb[0].mxu0
        %v2890 = vadd.f32 %v2794, %v2889
        %v2891 = vpop.f32.mrb[0].mxu0
        %2892 = vmatprep.mubr.bf16.mxu0 0
        %2893 = vmatmul.mubr.bf16.gmra.mrb[0].mxu0 %v2767
        %v2894 = vpop.f32.mrb[0].mxu0
        %v2895 = vadd.f32 %v2794, %v2894
        %v2896 = vpop.f32.mrb[0].mxu0
        %v2897 = vpop.f32.mrb[0].mxu0
        %v2898 = vadd.f32 %v2794, %v2897
        %v2899 = vpop.f32.mrb[0].mxu0
        %2900 = vmatprep.mubr.bf16.mxu0 0
        %2901 = vmatmul.mubr.bf16.gmra.mrb[0].mxu0 %v2768
        %v2902 = vpop.f32.mrb[0].mxu0
        %v2903 = vadd.f32 %v2794, %v2902
        %v2904 = vpop.f32.mrb[0].mxu0
        %v2905 = vpop.f32.mrb[0].mxu0
        %v2906 = vadd.f32 %v2794, %v2905
        %v2907 = vpop.f32.mrb[0].mxu0
        %2908 = vmatprep.mubr.bf16.mxu0 0
        %2909 = vmatmul.mubr.bf16.gmra.mrb[0].mxu0 %v2769
        %v2910 = vpop.f32.mrb[0].mxu0
        %v2911 = vadd.f32 %v2794, %v2910
        %v2912 = vpop.f32.mrb[0].mxu0
        %v2913 = vpop.f32.mrb[0].mxu0
        %v2914 = vadd.f32 %v2794, %v2913
        %v2915 = vpop.f32.mrb[0].mxu0
        %2916 = vmatprep.mubr.bf16.mxu0 0
        %2917 = vmatmul.mubr.bf16.gmra.mrb[0].mxu0 %v2770
        %v2918 = vpop.f32.mrb[0].mxu0
        %v2919 = vadd.f32 %v2794, %v2918
        %v2920 = vpop.f32.mrb[0].mxu0
        %v2921 = vpop.f32.mrb[0].mxu0
        %v2922 = vadd.f32 %v2794, %v2921
        %v2923 = vpop.f32.mrb[0].mxu0
        %2924 = vmatprep.mubr.bf16.mxu0 0
        %2925 = vmatmul.mubr.bf16.gmra.mrb[0].mxu0 %v2771
        %v2926 = vpop.f32.mrb[0].mxu0
        %v2927 = vadd.f32 %v2794, %v2926
        %v2928 = vpop.f32.mrb[0].mxu0
        %v2929 = vpop.f32.mrb[0].mxu0
        %v2930 = vadd.f32 %v2794, %v2929
        %v2931 = vpop.f32.mrb[0].mxu0
        %2932 = vmatprep.mubr.bf16.mxu0 0
        %2933 = vmatmul.mubr.bf16.gmra.mrb[0].mxu0 %v2772
        %v2934 = vpop.f32.mrb[0].mxu0
        %v2935 = vadd.f32 %v2794, %v2934
        %v2936 = vpop.f32.mrb[0].mxu0
        %v2937 = vpop.f32.mrb[0].mxu0
        %v2938 = vadd.f32 %v2794, %v2937
        %v2939 = vpop.f32.mrb[0].mxu0
        %2940 = vdwg.mxu0
        %2941 = vst [vmem:[%s190] sm:$0xff] %v2879
        %2942 = vst [vmem:[%s190 + $0x8] sm:$0xff] %v2882
        %2943 = vst [vmem:[%s190 + $0x10] sm:$0xff] %v2887
        %2944 = vst [vmem:[%s190 + $0x18] sm:$0xff] %v2890
        %2945 = vst [vmem:[%s190 + $0x20] sm:$0xff] %v2895
        %2946 = vst [vmem:[%s190 + $0x28] sm:$0xff] %v2898
        %2947 = vst [vmem:[%s190 + $0x30] sm:$0xff] %v2903
        %2948 = vst [vmem:[%s190 + $0x38] sm:$0xff] %v2906
        %2949 = vst [vmem:[%s190 + $0x40] sm:$0xff] %v2911
        %2950 = vst [vmem:[%s190 + $0x48] sm:$0xff] %v2914
        %2951 = vst [vmem:[%s190 + $0x50] sm:$0xff] %v2919
        %2952 = vst [vmem:[%s190 + $0x58] sm:$0xff] %v2922
        %2953 = vst [vmem:[%s190 + $0x60] sm:$0xff] %v2927
        %2954 = vst [vmem:[%s190 + $0x68] sm:$0xff] %v2930
        %2955 = vst [vmem:[%s190 + $0x70] sm:$0xff] %v2935
        %2956 = vst [vmem:[%s190 + $0x78] sm:$0xff] %v2938
        %s2957 = sand.u32 %s115, 1
        %s2958 = scalar_lea.sflag [#allocation3], %s2957
        %s2959 = sand.u32 %s115, 1
        %s2960 = smul.addr %s2959, 128
        %s2961 = scalar_lea.vmem [#allocation2], %s2960
        // Predicated region
        $region37: #{multi_head_attention.1} parent=35 // pred_check
          %p2962 = pneg %p125
        $region38: #{multi_head_attention.1} parent=35 // pred_check_branch
          %2964 = sbr.rel (%p2962) target = $region40
        $region39: #{multi_head_attention.1} parent=35 // pred_region
          %s2966 = ssub.s32 2048, 2048
          %2967 = vsyncadd %s2958, %s2966
          %s2968 = smul.addr %s18, 16
          %s2969 = smul.addr %s2968, 128
          %s2970 = scalar_lea.hbm %s4, %s2969
          %s2971 = sshll.u32 %s2961, 4
          %s2972 = int_to_ptr.vmem [resolvable:$true] %s2971
          %2977 = dma.vmem_to_hbm [thread:$0]  %s2972, 2048, %s2970, %s2958, 128, 128, 8
        $region40: #{multi_head_attention.1} parent=35 // pred_fallthru
          _
      $region36: #{multi_head_attention.1} parent=5 // pred_fallthru
        _
      %p2978 = scmp.le.s32.totalorder 2, %s13
      // Predicated region
      $region41: #{multi_head_attention.1} parent=5 // pred_check
        %p2979 = pneg %p2978
      $region42: #{multi_head_attention.1} parent=5 // pred_check_branch
        %2981 = sbr.rel (%p2979) target = $region44
      $region43: #{multi_head_attention.1} parent=5 // pred_region
        %s2982 = ssub.s32 %s13, 2
        // Predicated region
        $region45: #{multi_head_attention.1} parent=43 // pred_check
          %p2983 = pneg %p131
        $region46: #{multi_head_attention.1} parent=43 // pred_check_branch
          %2985 = sbr.rel (%p2983) target = $region48
        $region47: #{multi_head_attention.1} parent=43 // pred_region
          %s2986 = sand.u32 %s116, 1
          %s2987 = scalar_lea.sflag [#allocation3], %s2986
          %s2988 = sand.u32 %s116, 1
          %s2989 = smul.addr %s2988, 128
          %s2990 = scalar_lea.vmem [#allocation2], %s2989
          %2991 = dma.done %s2987, 2048
        $region48: #{multi_head_attention.1} parent=43 // pred_fallthru
          _
      $region44: #{multi_head_attention.1} parent=5 // pred_fallthru
        _
    $region6: #{multi_head_attention.1} parent=1 // loop_footer
      %s17 = sadd.s32 1, %s13
    $region7: #{multi_head_attention.1} parent=1 // loop_footer_branch
      %12 = sbr.rel target = $region3
    $region8: #{multi_head_attention.1} parent=1 // loop_exit
      _
    %2992 = vsyncpa [#allocation3], 1
    %s2993 = scalar_lea.sflag [#allocation3], 1
    %2994 = vsyncpa %s2993, 1

</llo_original>
